<compile_context>
chip_gen: v7x
topology: tpu7x:2x2x1
jax: 0.10.0
libtpu: 0.0.40
codegen_flags: <defaults>
</compile_context>

<pallas_src>
import math
from functools import partial

import jax
import jax.numpy as jnp
from jax.experimental import pallas as pl
from jax.experimental.pallas import tpu as pltpu


def _round_up(a, b):
    return (a + b - 1) // b * b


def _vmem_capacity_bytes():
    """Physical VMEM per TensorCore; conservative (v7x) fallback."""
    try:
        info = pltpu.get_tpu_info()
        cap = getattr(info, "vmem_capacity_bytes", None)
        if cap:
            return int(cap)
    except Exception:
        pass
    return 64 * 2**20


def _select_tn(cout):
    """Output-channel tile: 256 on 256-wide-MXU chips (v6e/v7x), else 128."""
    if cout <= 128:
        return 128
    try:
        kind = jax.devices()[0].device_kind.lower()
    except Exception:
        kind = ""
    narrow_mxu = any(t in kind for t in ("v2", "v3", "v4", "v5 lite", "v5e"))
    return 128 if narrow_mxu else 256


def pack_down_block_params(weight, bias, tn=None):
    """Repack Conv2d params once per weight update (hoisted out of forward).

    weight: (Cout, Cin, 3, 3), bias: (Cout,)
    returns w_packed (6, 2*Cin, Cout_p) bf16, b_pad (1, Cout_p) f32.

    Tap t = 2*kh + g; within a tap the lane layout is pw*Cin + c, where
    (g, pw) -> kw is (0,0)->0, (0,1)->1, (1,0)->2 and (1,1) is zero padding.
    """
    cout, cin = int(weight.shape[0]), int(weight.shape[1])
    if tn is None:
        tn = _select_tn(cout)
    cout_p = _round_up(cout, tn)
    wt = jnp.transpose(weight, (2, 3, 1, 0)).astype(jnp.float32)   # (3,3,Cin,Cout)
    wk = jnp.zeros((3, 2, 2, cin, cout_p), jnp.float32)
    wk = wk.at[:, 0, 0, :, :cout].set(wt[:, 0])   # kw = 0
    wk = wk.at[:, 0, 1, :, :cout].set(wt[:, 1])   # kw = 1
    wk = wk.at[:, 1, 0, :, :cout].set(wt[:, 2])   # kw = 2
    # wk[:, 1, 1] stays zero (never a real tap).
    w_packed = wk.reshape(6, 2 * cin, cout_p).astype(jnp.bfloat16)
    b_pad = jnp.zeros((1, cout_p), jnp.float32).at[0, :cout].set(
        bias.astype(jnp.float32))
    return w_packed, b_pad


def _make_kernel(*, th, wo_p, cin, tn, fuse_k):
    tm = th * wo_p
    kc = 2 * cin

    def kernel(x_ref, w_ref, b_ref, o_ref):
        # x_ref: (th+1, 2, wq, 2*Cin) bf16, w_ref: (6, 2*Cin, tn) bf16,
        # b_ref: (1, tn) f32, o_ref: (th, wo_p, tn) out_dtype.
        taps = []
        for kh in range(3):
            dh, ph = kh // 2, kh % 2          # hq row offset / H-phase of tap kh
            for g in range(2):                # g=0 -> kw in {0,1}; g=1 -> kw=2
                taps.append(x_ref[dh:dh + th, ph, g:g + wo_p, :])  # (th, wo_p, 2Cin)
        if fuse_k:
            # Single MXU matmul with K = 12*Cin (lane-aligned concat: Cin >= 64).
            patches = jnp.concatenate(taps, axis=-1).reshape(tm, 6 * kc)
            w2 = w_ref[...].reshape(6 * kc, tn)
            acc = jnp.dot(patches, w2, preferred_element_type=jnp.float32)
        else:
            # Small-channel fallback (2*Cin not a multiple of 128): 6 accumulated
            # tap matmuls.  This regime is inherently lane-starved; prefer the
            # fused single-matmul path (Cin >= 64) for real DownBlock shapes.
            acc = jnp.zeros((tm, tn), jnp.float32)
            for t, tap in enumerate(taps):
                acc = acc + jnp.dot(tap.reshape(tm, kc), w_ref[t],
                                    preferred_element_type=jnp.float32)
        acc = acc + b_ref[...]                                  # f32 bias add
        o_ref[...] = acc.reshape(th, wo_p, tn).astype(o_ref.dtype)

    return kernel


def _conv3x3_s2(x6, w_packed, b_pad, *, n, n_ht, th, ho_p, wo_p, cin, cout_p,
                tn, out_dtype):
    """x6: (N*n_ht, th+1, 2, Wq, 2*Cin) bf16 (phase-folded, halo-duplicated)."""
    wq = wo_p + 1
    tm = th * wo_p
    fuse_k = (2 * cin) % 128 == 0
    kernel = _make_kernel(th=th, wo_p=wo_p, cin=cin, tn=tn, fuse_k=fuse_k)

    n_j = cout_p // tn
    grid = (n, n_j, n_ht)

    out_isz = jnp.dtype(out_dtype).itemsize
    in_blk = (th + 1) * 2 * wq * 2 * cin * 2
    w_blk = 6 * 2 * cin * tn * 2
    b_blk = tn * 4
    out_blk = tm * tn * out_isz
    patches_blk = tm * (12 * cin if fuse_k else 2 * cin) * 2
    acc_blk = tm * tn * 4
    block_bytes = 2 * (in_blk + w_blk + b_blk + out_blk) + patches_blk + acc_blk
    cap = _vmem_capacity_bytes()
    vmem_limit = int(min(int(0.85 * cap),
                         max(32 * 2**20, int(1.6 * block_bytes))))

    flops = 2 * n * n_ht * tm * (12 * cin) * cout_p
    bytes_accessed = (x6.size * x6.dtype.itemsize
                      + w_packed.size * w_packed.dtype.itemsize
                      + b_pad.size * b_pad.dtype.itemsize
                      + n * ho_p * wo_p * cout_p * out_isz)

    return pl.pallas_call(
        kernel,
        out_shape=jax.ShapeDtypeStruct((n, ho_p, wo_p, cout_p), out_dtype),
        grid_spec=pltpu.PrefetchScalarGridSpec(
            num_scalar_prefetch=0,
            grid=grid,
            in_specs=[
                pl.BlockSpec((None, th + 1, 2, wq, 2 * cin),
                             lambda b, j, h: (b * n_ht + h, 0, 0, 0, 0)),
                pl.BlockSpec((6, 2 * cin, tn), lambda b, j, h: (0, 0, j)),
                pl.BlockSpec((1, tn), lambda b, j, h: (0, j)),
            ],
            out_specs=pl.BlockSpec((None, th, wo_p, tn),
                                   lambda b, j, h: (b, h, 0, j)),
        ),
        compiler_params=pltpu.CompilerParams(
            dimension_semantics=("parallel", "parallel", "parallel"),
            vmem_limit_bytes=vmem_limit,
        ),
        cost_estimate=pl.CostEstimate(flops=flops, transcendentals=0,
                                      bytes_accessed=bytes_accessed),
    )(x6, w_packed, b_pad)


def _down_block_nhwc(x_nhwc, w_packed, b_pad, cout, out_dtype):
    n, h, w, cin = x_nhwc.shape
    assert w_packed.shape[:2] == (6, 2 * cin), (w_packed.shape, cin)
    cout_p = int(w_packed.shape[2])
    tn = _select_tn(cout)
    if cout_p % tn:
        tn = 128
    assert cout_p % tn == 0

    ho = (h - 1) // 2 + 1
    wo = (w - 1) // 2 + 1
    wo_p = _round_up(wo, 16)        # bf16 sublane tile: layout-preserving reshapes
    wq = wo_p + 1

    # M tile: th output rows per grid step (~256-512 output pixels) so the f32
    # accumulator stays in vregs; shrink th if the per-step footprint would
    # exceed ~half of physical VMEM (64 MiB on v7x, 128 MiB on v5e/v6e).
    tm_target = 512 if tn == 128 else 256
    th = max(1, min(ho, max(1, tm_target // wo_p)))
    cap = _vmem_capacity_bytes()
    out_isz = jnp.dtype(out_dtype).itemsize

    def _block_bytes(th_):
        tm_ = th_ * wo_p
        return (2 * ((th_ + 1) * 2 * wq * 2 * cin * 2    # input (double-buffered)
                     + 12 * cin * tn * 2                 # weights
                     + tn * 4                            # bias
                     + tm_ * tn * out_isz)               # output
                + tm_ * 12 * cin * 2                     # live patches
                + tm_ * tn * 4)                          # live f32 accumulator

    while th > 1 and _block_bytes(th) > cap // 2:
        th = max(1, th // 2)

    ho_p = _round_up(ho, th)
    n_ht = ho_p // th
    hq = ho_p + 1
    hp, wp = 2 * hq, 2 * wq

    # --- input: bf16 cast + zero pad + phase fold (free reshape) + halo dup ---
    xb = x_nhwc.astype(jnp.bfloat16)
    xpad = jnp.pad(xb, ((0, 0), (1, hp - 1 - h), (1, wp - 1 - w), (0, 0)))
    # x5[n, q, ph, j, pw*Cin + c] == xpad[n, 2q + ph, 2j + pw, c]
    x5 = xpad.reshape(n, hq, 2, wq, 2 * cin)
    # Duplicate the single halo row each M tile needs (~1/th extra input bytes)
    # so kernel input blocks are plain non-overlapping BlockSpec tiles.
    main = x5[:, :ho_p].reshape(n, n_ht, th, 2, wq, 2 * cin)
    halo = x5[:, th::th][:, :, None]
    x6 = jnp.concatenate([main, halo], axis=2).reshape(
        n * n_ht, th + 1, 2, wq, 2 * cin)

    out = _conv3x3_s2(x6, w_packed, b_pad, n=n, n_ht=n_ht, th=th, ho_p=ho_p,
                      wo_p=wo_p, cin=cin, cout_p=cout_p, tn=tn,
                      out_dtype=out_dtype)
    return out[:, :ho, :wo, :cout]                        # drop pad rows/cols/chans


@partial(jax.jit, static_argnames=("cout", "out_dtype"))
def down_block_apply_nhwc(x_nhwc, temb, w_packed, b_pad, *, cout,
                          out_dtype=jnp.bfloat16):
    """NHWC fast path (no boundary transposes); returns (N, Ho, Wo, Cout)."""
    del temb  # DownBlock.forward ignores temb
    return _down_block_nhwc(x_nhwc, w_packed, b_pad, cout, out_dtype)


@partial(jax.jit, static_argnames=("cout", "out_dtype"))
def down_block_apply(x_nchw, temb, w_packed, b_pad, *, cout,
                     out_dtype=jnp.bfloat16):
    """NCHW entry matching the PyTorch module; returns (N, Cout, Ho, Wo)."""
    del temb
    # TODO(synk): if the surrounding model runs NHWC end-to-end, use
    # down_block_apply_nhwc and drop both full-HBM-pass boundary transposes.
    x_nhwc = jnp.transpose(x_nchw, (0, 2, 3, 1))
    out = _down_block_nhwc(x_nhwc, w_packed, b_pad, cout, out_dtype)
    return jnp.transpose(out, (0, 3, 1, 2))


def down_block_forward(x_nchw, temb, weight, bias, out_dtype=jnp.bfloat16):
    """Convenience wrapper that packs per call; prefer packing once via
    pack_down_block_params + down_block_apply in a training/inference loop."""
    w_packed, b_pad = pack_down_block_params(weight, bias)
    return down_block_apply(x_nchw, temb, w_packed, b_pad,
                            cout=int(weight.shape[0]), out_dtype=out_dtype)


def _reference_conv(x, weight, bias):
    # XLA conv on bf16-rounded inputs (kernel multiplies bf16, accumulates f32).
    xr = x.astype(jnp.bfloat16).astype(jnp.float32)
    wr = weight.astype(jnp.bfloat16).astype(jnp.float32)
    out = jax.lax.conv_general_dilated(
        xr, wr, window_strides=(2, 2), padding=((1, 1), (1, 1)),
        dimension_numbers=("NCHW", "OIHW", "NCHW"))
    return out + bias.reshape(1, -1, 1, 1)


def _run_case(key, n, cin, h, w, cout):
    kx, kt, kw_, kb = jax.random.split(key, 4)
    x = jax.random.normal(kx, (n, cin, h, w), dtype=jnp.float32)
    temb = jax.random.normal(kt, (n, 32), dtype=jnp.float32)  # unused by forward

    fan_in = cin * 9
    bound = 1.0 / math.sqrt(fan_in)
    weight = jax.random.uniform(kw_, (cout, cin, 3, 3), jnp.float32, -bound, bound)
    bias = jax.random.uniform(kb, (cout,), jnp.float32, -bound, bound)

    # Pack weights once (hoisted out of the per-step forward path).
    w_packed, b_pad = pack_down_block_params(weight, bias)
    out = down_block_apply(x, temb, w_packed, b_pad, cout=cout)
    out = jax.block_until_ready(out)

    ho = (h - 1) // 2 + 1
    wo = (w - 1) // 2 + 1
    assert out.shape == (n, cout, ho, wo), out.shape
    ref = _reference_conv(x, weight, bias)
    err = float(jnp.max(jnp.abs(out.astype(jnp.float32) - ref)))
    assert err < 3e-2, (cin, cout, err)
    return err


if __name__ == "__main__":
    key = jax.random.PRNGKey(0)
    k1, k2 = jax.random.split(key)
    # Small-channel module config (exercises the 6-tap-matmul fallback path).
    _run_case(k1, n=2, cin=4, h=16, w=16, cout=8)
    # Lane-aligned config (Cin >= 64): fused single-matmul K = 12*Cin path.
    _run_case(k2, n=2, cin=64, h=16, w=16, cout=128)
    print("KERNEL_OK")
</pallas_src>

<mosaic_0001>
module attributes {stable_mosaic.version = 11 : i64} {
  func.func @kernel(%arg0: i32, %arg1: i32, %arg2: i32, %arg3: memref<1x9x2x17x8xbf16, #tpu.memory_space<vmem>>, %arg4: memref<6x8x128xbf16, #tpu.memory_space<vmem>>, %arg5: memref<1x128xf32, #tpu.memory_space<vmem>>, %arg6: memref<1x8x16x128xbf16, #tpu.memory_space<vmem>>) attributes {dimension_semantics = [#tpu.dimension_semantics<parallel>, #tpu.dimension_semantics<parallel>, #tpu.dimension_semantics<parallel>], iteration_bounds = array<i64: 2, 1, 1>, scalar_prefetch = 0 : i64, scratch_operands = 0 : i64, tpu.core_type = #tpu.core_type<tc>, window_params = [{transform_indices = @transform_0, window_bounds = array<i64: 1, 9, 2, 17, 8>}, {transform_indices = @transform_1, window_bounds = array<i64: 6, 8, 128>}, {transform_indices = @transform_2, window_bounds = array<i64: 1, 128>}, {transform_indices = @transform_3, window_bounds = array<i64: 1, 8, 16, 128>}]} {
    %c0 = arith.constant 0 : index
    %c0_0 = arith.constant 0 : index
    %c0_1 = arith.constant 0 : index
    %c0_2 = arith.constant 0 : index
    %c0_3 = arith.constant 0 : index
    %0 = vector.load %arg3[%c0, %c0_0, %c0_1, %c0_2, %c0_3] : memref<1x9x2x17x8xbf16, #tpu.memory_space<vmem>>, vector<1x8x1x16x8xbf16>
    %1 = vector.shape_cast %0 : vector<1x8x1x16x8xbf16> to vector<8x16x8xbf16>
    %c0_4 = arith.constant 0 : index
    %c0_5 = arith.constant 0 : index
    %c0_6 = arith.constant 0 : index
    %c1 = arith.constant 1 : index
    %c0_7 = arith.constant 0 : index
    %2 = vector.load %arg3[%c0_4, %c0_5, %c0_6, %c1, %c0_7] : memref<1x9x2x17x8xbf16, #tpu.memory_space<vmem>>, vector<1x8x1x16x8xbf16>
    %3 = vector.shape_cast %2 : vector<1x8x1x16x8xbf16> to vector<8x16x8xbf16>
    %c0_8 = arith.constant 0 : index
    %c0_9 = arith.constant 0 : index
    %c1_10 = arith.constant 1 : index
    %c0_11 = arith.constant 0 : index
    %c0_12 = arith.constant 0 : index
    %4 = vector.load %arg3[%c0_8, %c0_9, %c1_10, %c0_11, %c0_12] : memref<1x9x2x17x8xbf16, #tpu.memory_space<vmem>>, vector<1x8x1x16x8xbf16>
    %5 = vector.shape_cast %4 : vector<1x8x1x16x8xbf16> to vector<8x16x8xbf16>
    %c0_13 = arith.constant 0 : index
    %c0_14 = arith.constant 0 : index
    %c1_15 = arith.constant 1 : index
    %c1_16 = arith.constant 1 : index
    %c0_17 = arith.constant 0 : index
    %6 = vector.load %arg3[%c0_13, %c0_14, %c1_15, %c1_16, %c0_17] : memref<1x9x2x17x8xbf16, #tpu.memory_space<vmem>>, vector<1x8x1x16x8xbf16>
    %7 = vector.shape_cast %6 : vector<1x8x1x16x8xbf16> to vector<8x16x8xbf16>
    %c0_18 = arith.constant 0 : index
    %c1_19 = arith.constant 1 : index
    %c0_20 = arith.constant 0 : index
    %c0_21 = arith.constant 0 : index
    %c0_22 = arith.constant 0 : index
    %8 = vector.load %arg3[%c0_18, %c1_19, %c0_20, %c0_21, %c0_22] : memref<1x9x2x17x8xbf16, #tpu.memory_space<vmem>>, vector<1x8x1x16x8xbf16>
    %9 = vector.shape_cast %8 : vector<1x8x1x16x8xbf16> to vector<8x16x8xbf16>
    %c0_23 = arith.constant 0 : index
    %c1_24 = arith.constant 1 : index
    %c0_25 = arith.constant 0 : index
    %c1_26 = arith.constant 1 : index
    %c0_27 = arith.constant 0 : index
    %10 = vector.load %arg3[%c0_23, %c1_24, %c0_25, %c1_26, %c0_27] : memref<1x9x2x17x8xbf16, #tpu.memory_space<vmem>>, vector<1x8x1x16x8xbf16>
    %11 = vector.shape_cast %10 : vector<1x8x1x16x8xbf16> to vector<8x16x8xbf16>
    %cst = arith.constant 0.000000e+00 : f32
    %12 = vector.broadcast %cst : f32 to vector<128x128xf32>
    %13 = vector.shape_cast %1 : vector<8x16x8xbf16> to vector<128x8xbf16>
    %c0_28 = arith.constant 0 : index
    %c0_29 = arith.constant 0 : index
    %c0_30 = arith.constant 0 : index
    %14 = vector.load %arg4[%c0_28, %c0_29, %c0_30] : memref<6x8x128xbf16, #tpu.memory_space<vmem>>, vector<1x8x128xbf16>
    %15 = vector.shape_cast %14 : vector<1x8x128xbf16> to vector<8x128xbf16>
    %cst_31 = arith.constant dense<0.000000e+00> : vector<128x128xf32>
    %16 = tpu.matmul %13, %15, %cst_31 {dimension_numbers = #tpu.dot_dimension_numbers<[1], [0], [0], [1], [0, 0, 1, 1], [], []>} : vector<128x8xbf16>, vector<8x128xbf16>, vector<128x128xf32> -> vector<128x128xf32>
    %17 = arith.addf %12, %16 : vector<128x128xf32>
    %18 = vector.shape_cast %3 : vector<8x16x8xbf16> to vector<128x8xbf16>
    %c1_32 = arith.constant 1 : index
    %c0_33 = arith.constant 0 : index
    %c0_34 = arith.constant 0 : index
    %19 = vector.load %arg4[%c1_32, %c0_33, %c0_34] : memref<6x8x128xbf16, #tpu.memory_space<vmem>>, vector<1x8x128xbf16>
    %20 = vector.shape_cast %19 : vector<1x8x128xbf16> to vector<8x128xbf16>
    %cst_35 = arith.constant dense<0.000000e+00> : vector<128x128xf32>
    %21 = tpu.matmul %18, %20, %cst_35 {dimension_numbers = #tpu.dot_dimension_numbers<[1], [0], [0], [1], [0, 0, 1, 1], [], []>} : vector<128x8xbf16>, vector<8x128xbf16>, vector<128x128xf32> -> vector<128x128xf32>
    %22 = arith.addf %17, %21 : vector<128x128xf32>
    %23 = vector.shape_cast %5 : vector<8x16x8xbf16> to vector<128x8xbf16>
    %c2 = arith.constant 2 : index
    %c0_36 = arith.constant 0 : index
    %c0_37 = arith.constant 0 : index
    %24 = vector.load %arg4[%c2, %c0_36, %c0_37] : memref<6x8x128xbf16, #tpu.memory_space<vmem>>, vector<1x8x128xbf16>
    %25 = vector.shape_cast %24 : vector<1x8x128xbf16> to vector<8x128xbf16>
    %cst_38 = arith.constant dense<0.000000e+00> : vector<128x128xf32>
    %26 = tpu.matmul %23, %25, %cst_38 {dimension_numbers = #tpu.dot_dimension_numbers<[1], [0], [0], [1], [0, 0, 1, 1], [], []>} : vector<128x8xbf16>, vector<8x128xbf16>, vector<128x128xf32> -> vector<128x128xf32>
    %27 = arith.addf %22, %26 : vector<128x128xf32>
    %28 = vector.shape_cast %7 : vector<8x16x8xbf16> to vector<128x8xbf16>
    %c3 = arith.constant 3 : index
    %c0_39 = arith.constant 0 : index
    %c0_40 = arith.constant 0 : index
    %29 = vector.load %arg4[%c3, %c0_39, %c0_40] : memref<6x8x128xbf16, #tpu.memory_space<vmem>>, vector<1x8x128xbf16>
    %30 = vector.shape_cast %29 : vector<1x8x128xbf16> to vector<8x128xbf16>
    %cst_41 = arith.constant dense<0.000000e+00> : vector<128x128xf32>
    %31 = tpu.matmul %28, %30, %cst_41 {dimension_numbers = #tpu.dot_dimension_numbers<[1], [0], [0], [1], [0, 0, 1, 1], [], []>} : vector<128x8xbf16>, vector<8x128xbf16>, vector<128x128xf32> -> vector<128x128xf32>
    %32 = arith.addf %27, %31 : vector<128x128xf32>
    %33 = vector.shape_cast %9 : vector<8x16x8xbf16> to vector<128x8xbf16>
    %c4 = arith.constant 4 : index
    %c0_42 = arith.constant 0 : index
    %c0_43 = arith.constant 0 : index
    %34 = vector.load %arg4[%c4, %c0_42, %c0_43] : memref<6x8x128xbf16, #tpu.memory_space<vmem>>, vector<1x8x128xbf16>
    %35 = vector.shape_cast %34 : vector<1x8x128xbf16> to vector<8x128xbf16>
    %cst_44 = arith.constant dense<0.000000e+00> : vector<128x128xf32>
    %36 = tpu.matmul %33, %35, %cst_44 {dimension_numbers = #tpu.dot_dimension_numbers<[1], [0], [0], [1], [0, 0, 1, 1], [], []>} : vector<128x8xbf16>, vector<8x128xbf16>, vector<128x128xf32> -> vector<128x128xf32>
    %37 = arith.addf %32, %36 : vector<128x128xf32>
    %38 = vector.shape_cast %11 : vector<8x16x8xbf16> to vector<128x8xbf16>
    %c5 = arith.constant 5 : index
    %c0_45 = arith.constant 0 : index
    %c0_46 = arith.constant 0 : index
    %39 = vector.load %arg4[%c5, %c0_45, %c0_46] : memref<6x8x128xbf16, #tpu.memory_space<vmem>>, vector<1x8x128xbf16>
    %40 = vector.shape_cast %39 : vector<1x8x128xbf16> to vector<8x128xbf16>
    %cst_47 = arith.constant dense<0.000000e+00> : vector<128x128xf32>
    %41 = tpu.matmul %38, %40, %cst_47 {dimension_numbers = #tpu.dot_dimension_numbers<[1], [0], [0], [1], [0, 0, 1, 1], [], []>} : vector<128x8xbf16>, vector<8x128xbf16>, vector<128x128xf32> -> vector<128x128xf32>
    %42 = arith.addf %37, %41 : vector<128x128xf32>
    %c0_48 = arith.constant 0 : index
    %c0_49 = arith.constant 0 : index
    %43 = vector.load %arg5[%c0_48, %c0_49] : memref<1x128xf32, #tpu.memory_space<vmem>>, vector<1x128xf32>
    %44 = vector.broadcast %43 : vector<1x128xf32> to vector<128x128xf32>
    %45 = arith.addf %42, %44 : vector<128x128xf32>
    %46 = vector.shape_cast %45 : vector<128x128xf32> to vector<8x16x128xf32>
    %47 = arith.truncf %46 : vector<8x16x128xf32> to vector<8x16x128xbf16>
    %c0_50 = arith.constant 0 : index
    %c0_51 = arith.constant 0 : index
    %c0_52 = arith.constant 0 : index
    %c0_53 = arith.constant 0 : index
    %48 = vector.load %arg6[%c0_50, %c0_51, %c0_52, %c0_53] : memref<1x8x16x128xbf16, #tpu.memory_space<vmem>>, vector<1x8x16x128xbf16>
    %49 = vector.shape_cast %48 : vector<1x8x16x128xbf16> to vector<8x16x128xbf16>
    %50 = vector.shape_cast %47 : vector<8x16x128xbf16> to vector<1x8x16x128xbf16>
    tpu.vector_store %arg6[%c0_50, %c0_51, %c0_52, %c0_53], %50 {strides = array<i32>} : memref<1x8x16x128xbf16, #tpu.memory_space<vmem>>, vector<1x8x16x128xbf16>,
    return
  }
  func.func @transform_0(%arg0: i32, %arg1: i32, %arg2: i32) -> (i32, i32, i32, i32, i32) {
    %c1_i32 = arith.constant 1 : i32
    %0 = arith.muli %arg0, %c1_i32 : i32
    %1 = arith.addi %0, %arg2 : i32
    %c0_i32 = arith.constant 0 : i32
    %c0_i32_0 = arith.constant 0 : i32
    %c0_i32_1 = arith.constant 0 : i32
    %c0_i32_2 = arith.constant 0 : i32
    %c0_i32_3 = arith.constant 0 : i32
    return %1, %c0_i32, %c0_i32_0, %c0_i32_1, %c0_i32_2 : i32, i32, i32, i32, i32
  }
  func.func @transform_1(%arg0: i32, %arg1: i32, %arg2: i32) -> (i32, i32, i32) {
    %c0_i32 = arith.constant 0 : i32
    %c0_i32_0 = arith.constant 0 : i32
    %c0_i32_1 = arith.constant 0 : i32
    return %c0_i32, %c0_i32_0, %arg1 : i32, i32, i32
  }
  func.func @transform_2(%arg0: i32, %arg1: i32, %arg2: i32) -> (i32, i32) {
    %c0_i32 = arith.constant 0 : i32
    %c0_i32_0 = arith.constant 0 : i32
    return %c0_i32, %arg1 : i32, i32
  }
  func.func @transform_3(%arg0: i32, %arg1: i32, %arg2: i32) -> (i32, i32, i32, i32) {
    %c0_i32 = arith.constant 0 : i32
    %c0_i32_0 = arith.constant 0 : i32
    return %arg0, %arg2, %c0_i32, %arg1 : i32, i32, i32, i32
  }
}

</mosaic_0001>

<llo_original>
// kernel: down_block_apply.1
$region0: #{down_block_apply.1}
  #allocation0 [shape = 'u32[]', space=smem, size = 0x4, offset = 0x4, fixed_abs, tag = 'smem constant byte address 0x4 - core index']
  #allocation1 [shape = 'u32[144,128]{1,0:T(1,128)}', space=vmem, size = 0x12000, scoped, tag = 'internal scratch']
  %s0 = inlined_call_operand.vmem [shape: bf16[2,9,2,17,8], index: 0, kind: input, shape index: {}]
  %s1 = inlined_call_operand.vmem [shape: bf16[6,8,128], index: 1, kind: input, shape index: {}]
  %s2 = inlined_call_operand.vmem [shape: f32[1,128], index: 2, kind: input, shape index: {}]
  %s3 = inlined_call_operand.vmem [shape: bf16[2,8,16,128], index: 3, kind: output, shape index: {}]
  %s4 = sld [smem:[#allocation0]]
  $region45: #{down_block_apply.1} parent=0
    _
  %s6 = ssub.s32 1, %s4
  %s7 = scalar_select 0, %s6, %s4
  loop: start=0, step=1, limit=4
  $region2: #{down_block_apply.1} parent=0 // loop_pre_header
    _
  $region3: #{down_block_apply.1} parent=0 // loop_header
    %s9 = sphi 0, %s13
    %p10 = scmp.ge.s32.totalorder %s9, 4
    %s16 = sphi 0, %s35
    %s17 = sphi 0, %s31
    %s18 = sphi 0, %s27
    %s19 = sphi 0, %s16
    %s20 = sphi 0, %s17
    %s21 = sphi 0, %s18
    %s22 = sphi 0, %s19
    %s23 = sphi 0, %s20
    %s24 = sphi 0, %s21
    %s40 = sphi 0, %s42
    %s43 = sphi 0, %s40
    %s44 = sphi 0, %s43
    %s60 = sphi 0, %s44
    %s66 = sphi 0, %s68
    %s69 = sphi 0, %s66
    %s70 = sphi 0, %s69
    %s86 = sphi 0, %s70
    %s92 = sphi 0, %s94
    %s95 = sphi 0, %s92
    %s96 = sphi 0, %s95
    %s112 = sphi 0, %s96
    %s122 = sphi 0, %s124
    %s125 = sphi 0, %s122
    %s126 = sphi 0, %s125
    %s142 = sphi 0, %s126
  $region4: #{down_block_apply.1} parent=0 // loop_header_branch
    %12 = sbr.rel (%p10) target = $region8
  $region5: #{down_block_apply.1} parent=0 // loop_body
    %s14 = ssub.s32 %s9, 1
    %s15 = ssub.s32 %s9, 2
    %s25 = sadd.s32 1, %s18
    %p26 = scmp.ge.s32.totalorder %s25, 1
    %s27 = scalar_select %p26, 0, %s25
    %s28 = sadd.s32 1, %s17
    %s29 = scalar_select %p26, %s28, %s17
    %p30 = scmp.ge.s32.totalorder %s29, 1
    %s31 = scalar_select %p30, 0, %s29
    %s32 = sadd.s32 1, %s16
    %s33 = scalar_select %p30, %s32, %s16
    %p34 = scmp.ge.s32.totalorder %s33, 2
    %s35 = scalar_select %p34, 0, %s33
    %s36 = sadd.s32 %s16, %s18
    %s37 = sadd.s32 %s35, %s27
    %s38 = ssub.s32 %s36, %s37
    %p39 = scmp.eq.s32.totalorder %s38, 0
    %s41 = sadd.s32 %s40, 1
    %s42 = scalar_select %p39, %s40, %s41
    %p45 = pneg %p39
    %p46 = scmp.eq.s32.totalorder %s9, 1
    %p47 = por %p45, %p46
    %p48 = scmp.ne.s32.totalorder %s40, %s43
    %p49 = scmp.eq.s32.totalorder %s9, 0
    %p50 = por %p48, %p49
    %p51 = scmp.ne.s32.totalorder %s40, %s43
    %p52 = scmp.eq.s32.totalorder %s14, 1
    %p53 = por %p51, %p52
    %p54 = scmp.ne.s32.totalorder %s43, %s44
    %p55 = scmp.eq.s32.totalorder %s14, 0
    %p56 = por %p54, %p55
    %p57 = scmp.ne.s32.totalorder %s43, %s44
    %p58 = scmp.eq.s32.totalorder %s15, 1
    %p59 = por %p57, %p58
    %p61 = scmp.ne.s32.totalorder %s44, %s60
    %p62 = scmp.eq.s32.totalorder %s15, 0
    %p63 = por %p61, %p62
    %s64 = ssub.s32 %s17, %s31
    %p65 = scmp.eq.s32.totalorder %s64, 0
    %s67 = sadd.s32 %s66, 1
    %s68 = scalar_select %p65, %s66, %s67
    %p71 = pneg %p65
    %p72 = scmp.eq.s32.totalorder %s9, 1
    %p73 = por %p71, %p72
    %p74 = scmp.ne.s32.totalorder %s66, %s69
    %p75 = scmp.eq.s32.totalorder %s9, 0
    %p76 = por %p74, %p75
    %p77 = scmp.ne.s32.totalorder %s66, %s69
    %p78 = scmp.eq.s32.totalorder %s14, 1
    %p79 = por %p77, %p78
    %p80 = scmp.ne.s32.totalorder %s69, %s70
    %p81 = scmp.eq.s32.totalorder %s14, 0
    %p82 = por %p80, %p81
    %p83 = scmp.ne.s32.totalorder %s69, %s70
    %p84 = scmp.eq.s32.totalorder %s15, 1
    %p85 = por %p83, %p84
    %p87 = scmp.ne.s32.totalorder %s70, %s86
    %p88 = scmp.eq.s32.totalorder %s15, 0
    %p89 = por %p87, %p88
    %s90 = ssub.s32 %s17, %s31
    %p91 = scmp.eq.s32.totalorder %s90, 0
    %s93 = sadd.s32 %s92, 1
    %s94 = scalar_select %p91, %s92, %s93
    %p97 = pneg %p91
    %p98 = scmp.eq.s32.totalorder %s9, 1
    %p99 = por %p97, %p98
    %p100 = scmp.ne.s32.totalorder %s92, %s95
    %p101 = scmp.eq.s32.totalorder %s9, 0
    %p102 = por %p100, %p101
    %p103 = scmp.ne.s32.totalorder %s92, %s95
    %p104 = scmp.eq.s32.totalorder %s14, 1
    %p105 = por %p103, %p104
    %p106 = scmp.ne.s32.totalorder %s95, %s96
    %p107 = scmp.eq.s32.totalorder %s14, 0
    %p108 = por %p106, %p107
    %p109 = scmp.ne.s32.totalorder %s95, %s96
    %p110 = scmp.eq.s32.totalorder %s15, 1
    %p111 = por %p109, %p110
    %p113 = scmp.ne.s32.totalorder %s96, %s112
    %p114 = scmp.eq.s32.totalorder %s15, 0
    %p115 = por %p113, %p114
    %s116 = ssub.s32 %s16, %s35
    %s117 = ssub.s32 %s18, %s27
    %s118 = sor.u32 %s116, %s117
    %s119 = ssub.s32 %s17, %s31
    %s120 = sor.u32 %s118, %s119
    %p121 = scmp.eq.s32.totalorder %s120, 0
    %s123 = sadd.s32 %s122, 1
    %s124 = scalar_select %p121, %s122, %s123
    %p127 = pneg %p121
    %p128 = scmp.eq.s32.totalorder %s9, 1
    %p129 = por %p127, %p128
    %p130 = scmp.ne.s32.totalorder %s122, %s125
    %p131 = scmp.eq.s32.totalorder %s9, 0
    %p132 = por %p130, %p131
    %p133 = scmp.ne.s32.totalorder %s122, %s125
    %p134 = scmp.eq.s32.totalorder %s14, 1
    %p135 = por %p133, %p134
    %p136 = scmp.ne.s32.totalorder %s125, %s126
    %p137 = scmp.eq.s32.totalorder %s14, 0
    %p138 = por %p136, %p137
    %p139 = scmp.ne.s32.totalorder %s125, %s126
    %p140 = scmp.eq.s32.totalorder %s15, 1
    %p141 = por %p139, %p140
    %p143 = scmp.ne.s32.totalorder %s126, %s142
    %p144 = scmp.eq.s32.totalorder %s15, 0
    %p145 = por %p143, %p144
    %p146 = scmp.le.s32.totalorder 1, %s9
    %p147 = scmp.lt.s32.totalorder %s9, 3
    %p148 = pnand %p146, %p147
    %p149 = pneg %p148
    // Predicated region
    $region9: #{down_block_apply.1} parent=5 // pred_check
      _
    $region10: #{down_block_apply.1} parent=5 // pred_check_branch
      %151 = sbr.rel (%p148) target = $region12
    $region11: #{down_block_apply.1} parent=5 // pred_region
      %s152 = ssub.s32 %s9, 1
      // Predicated region
      $region13: #{down_block_apply.1} parent=11 // pred_check
        %p153 = pneg %p82
      $region14: #{down_block_apply.1} parent=11 // pred_check_branch
        %155 = sbr.rel (%p153) target = $region16
      $region15: #{down_block_apply.1} parent=11 // pred_region
        %p156 = scmp.lt.s32.totalorder %s20, 0
        %s157 = scalar_select %p156, %s20, 0
        %s158 = smul.addr %s157, 4
        %s159 = scalar_lea.vmem %s1, %s158
      $region16: #{down_block_apply.1} parent=11 // pred_fallthru
        _
      // Predicated region
      $region17: #{down_block_apply.1} parent=11 // pred_check
        %p160 = pneg %p108
      $region18: #{down_block_apply.1} parent=11 // pred_check_branch
        %162 = sbr.rel (%p160) target = $region20
      $region19: #{down_block_apply.1} parent=11 // pred_region
        %p163 = scmp.lt.s32.totalorder %s20, 0
        %s164 = scalar_select %p163, %s20, 0
        %s165 = scalar_lea.vmem %s2, %s164
      $region20: #{down_block_apply.1} parent=11 // pred_fallthru
        _
    $region12: #{down_block_apply.1} parent=5 // pred_fallthru
      _
    %p166 = scmp.lt.s32.totalorder %s9, 2
    // Predicated region
    $region21: #{down_block_apply.1} parent=5 // pred_check
      %p167 = pneg %p166
    $region22: #{down_block_apply.1} parent=5 // pred_check_branch
      %169 = sbr.rel (%p167) target = $region24
    $region23: #{down_block_apply.1} parent=5 // pred_region
      // Predicated region
      $region25: #{down_block_apply.1} parent=23 // pred_check
        %p170 = pneg %p50
      $region26: #{down_block_apply.1} parent=23 // pred_check_branch
        %172 = sbr.rel (%p170) target = $region28
      $region27: #{down_block_apply.1} parent=23 // pred_region
        %s173 = sadd.s32 %s16, %s18
        %p174 = scmp.lt.s32.totalorder %s173, 1
        %s175 = scalar_select %p174, %s173, 1
        %s176 = smul.addr %s175, 54
        %s177 = smul.addr %s176, 4
        %s178 = scalar_lea.vmem %s0, %s177
        %s179 = sadd.s32 %s16, %s18
      $region28: #{down_block_apply.1} parent=23 // pred_fallthru
        _
    $region24: #{down_block_apply.1} parent=5 // pred_fallthru
      _
    %p180 = scmp.le.s32.totalorder 1, %s9
    %p181 = scmp.lt.s32.totalorder %s9, 3
    %p182 = pnand %p180, %p181
    %p183 = pneg %p182
    // Predicated region
    $region29: #{down_block_apply.1} parent=5 // pred_check
      _
    $region30: #{down_block_apply.1} parent=5 // pred_check_branch
      %185 = sbr.rel (%p182) target = $region32
    $region31: #{down_block_apply.1} parent=5 // pred_region
      %s186 = ssub.s32 %s9, 1
      %s187 = sadd.s32 %s19, %s21
      %p188 = scmp.lt.s32.totalorder %s187, 1
      %s189 = scalar_select %p188, %s187, 1
      %s190 = smul.addr %s189, 54
      %s191 = smul.addr %s190, 4
      %s192 = scalar_lea.vmem %s0, %s191
      %p193 = pneg %p56
      %p194 = pneg %p53
      %p195 = scmp.lt.s32.totalorder %s20, 0
      %s196 = scalar_select %p195, %s20, 0
      %s197 = smul.addr %s196, 4
      %s198 = scalar_lea.vmem %s1, %s197
      %p199 = pneg %p82
      %p200 = pneg %p79
      %p201 = scmp.lt.s32.totalorder %s20, 0
      %s202 = scalar_select %p201, %s20, 0
      %s203 = scalar_lea.vmem %s2, %s202
      %p204 = pneg %p108
      %p205 = pneg %p105
      %p206 = pneg %p138
      %p207 = pneg %p135
      %s208 = smul.u32 8, %s21
      %p209 = scmp.lt.s32.totalorder %s19, 1
      %s210 = scalar_select %p209, %s19, 1
      %p211 = scmp.lt.s32.totalorder %s208, 7
      %s212 = scalar_select %p211, %s208, 7
      %p213 = scmp.lt.s32.totalorder %s20, 0
      %s214 = scalar_select %p213, %s20, 0
      %s215 = smul.addr %s212, 2
      %s216 = sadd.s32 %s214, %s215
      %s217 = smul.addr %s210, 16
      %s218 = sadd.s32 %s216, %s217
      %s219 = smul.addr %s218, 4
      %s220 = scalar_lea.vmem %s3, %s219
      %s221 = sadd.s32 %s19, %s21
      %p222 = scmp.lt.s32.totalorder %s221, 1
      %s223 = scalar_select %p222, %s221, 1
      %s224 = smul.addr %s223, 54
      %s225 = smul.addr %s224, 4
      %s226 = scalar_lea.vmem %s0, %s225
      %s227 = sadd.s32 %s19, %s21
      %p228 = scmp.lt.s32.totalorder %s20, 0
      %s229 = scalar_select %p228, %s20, 0
      %s230 = smul.addr %s229, 4
      %s231 = scalar_lea.vmem %s1, %s230
      %p232 = scmp.lt.s32.totalorder %s20, 0
      %s233 = scalar_select %p232, %s20, 0
      %s234 = scalar_lea.vmem %s2, %s233
      %s235 = smul.u32 8, %s21
      %p236 = scmp.lt.s32.totalorder %s19, 1
      %s237 = scalar_select %p236, %s19, 1
      %p238 = scmp.lt.s32.totalorder %s235, 7
      %s239 = scalar_select %p238, %s235, 7
      %p240 = scmp.lt.s32.totalorder %s20, 0
      %s241 = scalar_select %p240, %s20, 0
      %s242 = smul.addr %s239, 2
      %s243 = sadd.s32 %s241, %s242
      %s244 = smul.addr %s237, 16
      %s245 = sadd.s32 %s243, %s244
      %s246 = smul.addr %s245, 4
      %s247 = scalar_lea.vmem %s3, %s246
      %s248 = smul.u32 8, %s21
      %v250 = vld [vmem:[%s226] sm:$0xf]
      %v251 = vld [vmem:[%s226 + $0x4] sm:$0xf]
      %v252 = vld [vmem:[%s226 + $0x18] sm:$0xf]
      %v253 = vld [vmem:[%s226 + $0x1c] sm:$0xf]
      %v254 = vld [vmem:[%s226 + $0x30] sm:$0xf]
      %v255 = vld [vmem:[%s226 + $0x34] sm:$0xf]
      %v256 = vld [vmem:[%s226 + $0x48] sm:$0xf]
      %v257 = vld [vmem:[%s226 + $0x4c] sm:$0xf]
      %v258 = vld [vmem:[%s226 + $0x60] sm:$0xf]
      %v259 = vld [vmem:[%s226 + $0x64] sm:$0xf]
      %v260 = vld [vmem:[%s226 + $0x78] sm:$0xf]
      %v261 = vld [vmem:[%s226 + $0x7c] sm:$0xf]
      %v262 = vld [vmem:[%s226 + $0x90] sm:$0xf]
      %v263 = vld [vmem:[%s226 + $0x94] sm:$0xf]
      %v264 = vld [vmem:[%s226 + $0xa8] sm:$0xf]
      %v265 = vld [vmem:[%s226 + $0xac] sm:$0xf]
      %v266 = vld [vmem:[%s226 + $0x8] sm:$0x1]
      %v267 = vld [vmem:[%s226 + $0x20] sm:$0x1]
      %v268 = vld [vmem:[%s226 + $0x38] sm:$0x1]
      %v269 = vld [vmem:[%s226 + $0x50] sm:$0x1]
      %v270 = vld [vmem:[%s226 + $0x68] sm:$0x1]
      %v271 = vld [vmem:[%s226 + $0x80] sm:$0x1]
      %v272 = vld [vmem:[%s226 + $0x98] sm:$0x1]
      %v273 = vld [vmem:[%s226 + $0xb0] sm:$0x1]
      %s274 = scalar_lea.vmem %s226, 12
      %v275 = vld [vmem:[%s274] sm:$0xf]
      %v276 = vld [vmem:[%s274 + $0x4] sm:$0xf]
      %v277 = vld [vmem:[%s274 + $0x18] sm:$0xf]
      %v278 = vld [vmem:[%s274 + $0x1c] sm:$0xf]
      %v279 = vld [vmem:[%s274 + $0x30] sm:$0xf]
      %v280 = vld [vmem:[%s274 + $0x34] sm:$0xf]
      %v281 = vld [vmem:[%s274 + $0x48] sm:$0xf]
      %v282 = vld [vmem:[%s274 + $0x4c] sm:$0xf]
      %v283 = vld [vmem:[%s274 + $0x60] sm:$0xf]
      %v284 = vld [vmem:[%s274 + $0x64] sm:$0xf]
      %v285 = vld [vmem:[%s274 + $0x78] sm:$0xf]
      %v286 = vld [vmem:[%s274 + $0x7c] sm:$0xf]
      %v287 = vld [vmem:[%s274 + $0x90] sm:$0xf]
      %v288 = vld [vmem:[%s274 + $0x94] sm:$0xf]
      %v289 = vld [vmem:[%s274 + $0xa8] sm:$0xf]
      %v290 = vld [vmem:[%s274 + $0xac] sm:$0xf]
      %v291 = vld [vmem:[%s274 + $0x8] sm:$0x1]
      %v292 = vld [vmem:[%s274 + $0x20] sm:$0x1]
      %v293 = vld [vmem:[%s274 + $0x38] sm:$0x1]
      %v294 = vld [vmem:[%s274 + $0x50] sm:$0x1]
      %v295 = vld [vmem:[%s274 + $0x68] sm:$0x1]
      %v296 = vld [vmem:[%s274 + $0x80] sm:$0x1]
      %v297 = vld [vmem:[%s274 + $0x98] sm:$0x1]
      %v298 = vld [vmem:[%s274 + $0xb0] sm:$0x1]
      %s299 = scalar_lea.vmem %s226, 24
      %v300 = vld [vmem:[%s299] sm:$0xf]
      %v301 = vld [vmem:[%s299 + $0x4] sm:$0xf]
      %v302 = vld [vmem:[%s299 + $0x18] sm:$0xf]
      %v303 = vld [vmem:[%s299 + $0x1c] sm:$0xf]
      %v304 = vld [vmem:[%s299 + $0x30] sm:$0xf]
      %v305 = vld [vmem:[%s299 + $0x34] sm:$0xf]
      %v306 = vld [vmem:[%s299 + $0x48] sm:$0xf]
      %v307 = vld [vmem:[%s299 + $0x4c] sm:$0xf]
      %v308 = vld [vmem:[%s299 + $0x60] sm:$0xf]
      %v309 = vld [vmem:[%s299 + $0x64] sm:$0xf]
      %v310 = vld [vmem:[%s299 + $0x78] sm:$0xf]
      %v311 = vld [vmem:[%s299 + $0x7c] sm:$0xf]
      %v312 = vld [vmem:[%s299 + $0x90] sm:$0xf]
      %v313 = vld [vmem:[%s299 + $0x94] sm:$0xf]
      %v314 = vld [vmem:[%s299 + $0xa8] sm:$0xf]
      %v315 = vld [vmem:[%s299 + $0xac] sm:$0xf]
      %v316 = vld [vmem:[%s299 + $0x8] sm:$0x1]
      %v317 = vld [vmem:[%s299 + $0x20] sm:$0x1]
      %v318 = vld [vmem:[%s299 + $0x38] sm:$0x1]
      %v319 = vld [vmem:[%s299 + $0x50] sm:$0x1]
      %v320 = vld [vmem:[%s299 + $0x68] sm:$0x1]
      %v321 = vld [vmem:[%s299 + $0x80] sm:$0x1]
      %v322 = vld [vmem:[%s299 + $0x98] sm:$0x1]
      %v323 = vld [vmem:[%s299 + $0xb0] sm:$0x1]
      %v324 = vld [vmem:[%s231] sm:$0xf]
      %vm325 = vsmask.f32 3328
      %vm326 = vsmask.f32 7440
      %vm327 = vmor %vm325, %vm326
      %v329 = vshrl.u32 %v250, 16
      %v331 = vrot.slane %v329, 4
      %v332 = vshll.u32 %v250, 16
      %v334 = vrot.slane %v332, 5
      %v335 = vor.u32 %v331, %v334
      %v336 = vrot.slane %v335, 4
      %v338 = vshll.u32 %v251, 16
      %v340 = vrot.slane %v338, 5
      %v341 = vsel %vm327, %v336, %v340
      %v342 = vshrl.u32 %v251, 16
      %v344 = vrot.slane %v342, 4
      %v345 = vor.u32 %v344, %v340
      %v346 = vrot.slane %v345, 4
      %v348 = vshll.u32 %v266, 16
      %v350 = vrot.slane %v348, 5
      %v351 = vsel %vm327, %v346, %v350
      %v353 = vshrl.u32 %v252, 16
      %v355 = vrot.slane %v353, 4
      %v356 = vshll.u32 %v252, 16
      %v358 = vrot.slane %v356, 5
      %v359 = vor.u32 %v355, %v358
      %v360 = vrot.slane %v359, 4
      %v362 = vshll.u32 %v253, 16
      %v364 = vrot.slane %v362, 5
      %v365 = vsel %vm327, %v360, %v364
      %v366 = vshrl.u32 %v253, 16
      %v368 = vrot.slane %v366, 4
      %v369 = vor.u32 %v368, %v364
      %v370 = vrot.slane %v369, 4
      %v372 = vshll.u32 %v267, 16
      %v374 = vrot.slane %v372, 5
      %v375 = vsel %vm327, %v370, %v374
      %v377 = vshrl.u32 %v254, 16
      %v379 = vrot.slane %v377, 4
      %v380 = vshll.u32 %v254, 16
      %v382 = vrot.slane %v380, 5
      %v383 = vor.u32 %v379, %v382
      %v384 = vrot.slane %v383, 4
      %v386 = vshll.u32 %v255, 16
      %v388 = vrot.slane %v386, 5
      %v389 = vsel %vm327, %v384, %v388
      %v390 = vshrl.u32 %v255, 16
      %v392 = vrot.slane %v390, 4
      %v393 = vor.u32 %v392, %v388
      %v394 = vrot.slane %v393, 4
      %v396 = vshll.u32 %v268, 16
      %v398 = vrot.slane %v396, 5
      %v399 = vsel %vm327, %v394, %v398
      %v401 = vshrl.u32 %v256, 16
      %v403 = vrot.slane %v401, 4
      %v404 = vshll.u32 %v256, 16
      %v406 = vrot.slane %v404, 5
      %v407 = vor.u32 %v403, %v406
      %v408 = vrot.slane %v407, 4
      %v410 = vshll.u32 %v257, 16
      %v412 = vrot.slane %v410, 5
      %v413 = vsel %vm327, %v408, %v412
      %v414 = vshrl.u32 %v257, 16
      %v416 = vrot.slane %v414, 4
      %v417 = vor.u32 %v416, %v412
      %v418 = vrot.slane %v417, 4
      %v420 = vshll.u32 %v269, 16
      %v422 = vrot.slane %v420, 5
      %v423 = vsel %vm327, %v418, %v422
      %v425 = vshrl.u32 %v258, 16
      %v427 = vrot.slane %v425, 4
      %v428 = vshll.u32 %v258, 16
      %v430 = vrot.slane %v428, 5
      %v431 = vor.u32 %v427, %v430
      %v432 = vrot.slane %v431, 4
      %v434 = vshll.u32 %v259, 16
      %v436 = vrot.slane %v434, 5
      %v437 = vsel %vm327, %v432, %v436
      %v438 = vshrl.u32 %v259, 16
      %v440 = vrot.slane %v438, 4
      %v441 = vor.u32 %v440, %v436
      %v442 = vrot.slane %v441, 4
      %v444 = vshll.u32 %v270, 16
      %v446 = vrot.slane %v444, 5
      %v447 = vsel %vm327, %v442, %v446
      %v449 = vshrl.u32 %v260, 16
      %v451 = vrot.slane %v449, 4
      %v452 = vshll.u32 %v260, 16
      %v454 = vrot.slane %v452, 5
      %v455 = vor.u32 %v451, %v454
      %v456 = vrot.slane %v455, 4
      %v458 = vshll.u32 %v261, 16
      %v460 = vrot.slane %v458, 5
      %v461 = vsel %vm327, %v456, %v460
      %v462 = vshrl.u32 %v261, 16
      %v464 = vrot.slane %v462, 4
      %v465 = vor.u32 %v464, %v460
      %v466 = vrot.slane %v465, 4
      %v468 = vshll.u32 %v271, 16
      %v470 = vrot.slane %v468, 5
      %v471 = vsel %vm327, %v466, %v470
      %v473 = vshrl.u32 %v262, 16
      %v475 = vrot.slane %v473, 4
      %v476 = vshll.u32 %v262, 16
      %v478 = vrot.slane %v476, 5
      %v479 = vor.u32 %v475, %v478
      %v480 = vrot.slane %v479, 4
      %v482 = vshll.u32 %v263, 16
      %v484 = vrot.slane %v482, 5
      %v485 = vsel %vm327, %v480, %v484
      %v486 = vshrl.u32 %v263, 16
      %v488 = vrot.slane %v486, 4
      %v489 = vor.u32 %v488, %v484
      %v490 = vrot.slane %v489, 4
      %v492 = vshll.u32 %v272, 16
      %v494 = vrot.slane %v492, 5
      %v495 = vsel %vm327, %v490, %v494
      %v497 = vshrl.u32 %v264, 16
      %v499 = vrot.slane %v497, 4
      %v500 = vshll.u32 %v264, 16
      %v502 = vrot.slane %v500, 5
      %v503 = vor.u32 %v499, %v502
      %v504 = vrot.slane %v503, 4
      %v506 = vshll.u32 %v265, 16
      %v508 = vrot.slane %v506, 5
      %v509 = vsel %vm327, %v504, %v508
      %v510 = vshrl.u32 %v265, 16
      %v512 = vrot.slane %v510, 4
      %v513 = vor.u32 %v512, %v508
      %v514 = vrot.slane %v513, 4
      %v516 = vshll.u32 %v273, 16
      %v518 = vrot.slane %v516, 5
      %v519 = vsel %vm327, %v514, %v518
      %s520 = scalar_lea.vmem %s231, 4
      %v521 = vld [vmem:[%s520] sm:$0xf]
      %v522 = vunpack.c.l.b16 %v341
      %v523 = vunpack.c.l.b16 %v351
      %v524 = vunpack.c.l.b16 %v365
      %v525 = vunpack.c.l.b16 %v375
      %v526 = vunpack.c.l.b16 %v389
      %v527 = vunpack.c.l.b16 %v399
      %v528 = vunpack.c.l.b16 %v413
      %v529 = vunpack.c.l.b16 %v423
      %v530 = vunpack.c.l.b16 %v437
      %v531 = vunpack.c.l.b16 %v447
      %v532 = vunpack.c.l.b16 %v461
      %v533 = vunpack.c.l.b16 %v471
      %v534 = vunpack.c.l.b16 %v485
      %v535 = vunpack.c.l.b16 %v495
      %v536 = vunpack.c.l.b16 %v509
      %v537 = vunpack.c.l.b16 %v519
      %v538 = vpack.c.b16 %v523, %v522
      %v539 = vpack.c.b16 %v525, %v524
      %v540 = vpack.c.b16 %v527, %v526
      %v541 = vpack.c.b16 %v529, %v528
      %v542 = vpack.c.b16 %v531, %v530
      %v543 = vpack.c.b16 %v533, %v532
      %v544 = vpack.c.b16 %v535, %v534
      %v545 = vpack.c.b16 %v537, %v536
      %vm546 = vcmask 64512
      %v548 = vsel %vm546, %v538, 0
      %v551 = vsel %vm546, %v539, 0
      %v554 = vsel %vm546, %v540, 0
      %v557 = vsel %vm546, %v541, 0
      %v560 = vsel %vm546, %v542, 0
      %v563 = vsel %vm546, %v543, 0
      %v566 = vsel %vm546, %v544, 0
      %v569 = vsel %vm546, %v545, 0
      %vm571 = vcmask 1043456
      %v573 = vsel %vm571, %v521, 0
      %575 = vmatprep.subr.bf16.mxu0 0
      %576 = vmatpush1.bf16.msra.mxu0 %v573
      %577 = vmatprep.subr.bf16.mxu0 0
      %578 = vmatpush1.bf16.msra.mxu0 0
      %579 = vmatprep.subr.bf16.mxu0 0
      %580 = vmatpush1.bf16.msra.mxu0 0
      %581 = vmatprep.subr.bf16.mxu0 0
      %582 = vmatpush1.bf16.msra.mxu0 0
      %583 = vmatprep.subr.bf16.mxu0 0
      %584 = vmatpush1.bf16.msra.mxu0 0
      %585 = vmatprep.subr.bf16.mxu0 0
      %586 = vmatpush1.bf16.msra.mxu0 0
      %587 = vmatprep.subr.bf16.mxu0 0
      %588 = vmatpush1.bf16.msra.mxu0 0
      %589 = vmatprep.subr.bf16.mxu0 0
      %590 = vmatpush1.bf16.msra.mxu0 0
      %591 = vmatprep.subr.bf16.mxu0 0
      %592 = vmatpush1.bf16.msra.mxu0 0
      %593 = vmatprep.subr.bf16.mxu0 0
      %594 = vmatpush1.bf16.msra.mxu0 0
      %595 = vmatprep.subr.bf16.mxu0 0
      %596 = vmatpush1.bf16.msra.mxu0 0
      %597 = vmatprep.subr.bf16.mxu0 0
      %598 = vmatpush1.bf16.msra.mxu0 0
      %599 = vmatprep.subr.bf16.mxu0 0
      %600 = vmatpush1.bf16.msra.mxu0 0
      %601 = vmatprep.subr.bf16.mxu0 0
      %602 = vmatpush1.bf16.msra.mxu0 0
      %603 = vmatprep.subr.bf16.mxu0 0
      %604 = vmatpush1.bf16.msra.mxu0 0
      %605 = vmatprep.subr.bf16.mxu0 0
      %606 = vmatpush1.bf16.msra.mxu0 0
      %607 = vmatprep.mubr.bf16.mxu0 0
      %608 = vmatmul.mubr.bf16.gmra.mrb[0].mxu0 %v548
      %v609 = vpop.f32.mrb[0].mxu0
      %v610 = vadd.f32 0.0, %v609
      %v611 = vpop.f32.mrb[0].mxu0
      %v612 = vpop.f32.mrb[0].mxu0
      %v613 = vadd.f32 0.0, %v612
      %v614 = vpop.f32.mrb[0].mxu0
      %615 = vmatprep.mubr.bf16.mxu0 0
      %616 = vmatmul.mubr.bf16.gmra.mrb[0].mxu0 %v551
      %v617 = vpop.f32.mrb[0].mxu0
      %v618 = vadd.f32 0.0, %v617
      %v619 = vpop.f32.mrb[0].mxu0
      %v620 = vpop.f32.mrb[0].mxu0
      %v621 = vadd.f32 0.0, %v620
      %v622 = vpop.f32.mrb[0].mxu0
      %623 = vmatprep.mubr.bf16.mxu0 0
      %624 = vmatmul.mubr.bf16.gmra.mrb[0].mxu0 %v554
      %v625 = vpop.f32.mrb[0].mxu0
      %v626 = vadd.f32 0.0, %v625
      %v627 = vpop.f32.mrb[0].mxu0
      %v628 = vpop.f32.mrb[0].mxu0
      %v629 = vadd.f32 0.0, %v628
      %v630 = vpop.f32.mrb[0].mxu0
      %631 = vmatprep.mubr.bf16.mxu0 0
      %632 = vmatmul.mubr.bf16.gmra.mrb[0].mxu0 %v557
      %v633 = vpop.f32.mrb[0].mxu0
      %v634 = vadd.f32 0.0, %v633
      %v635 = vpop.f32.mrb[0].mxu0
      %v636 = vpop.f32.mrb[0].mxu0
      %v637 = vadd.f32 0.0, %v636
      %v638 = vpop.f32.mrb[0].mxu0
      %639 = vmatprep.mubr.bf16.mxu0 0
      %640 = vmatmul.mubr.bf16.gmra.mrb[0].mxu0 %v560
      %v641 = vpop.f32.mrb[0].mxu0
      %v642 = vadd.f32 0.0, %v641
      %v643 = vpop.f32.mrb[0].mxu0
      %v644 = vpop.f32.mrb[0].mxu0
      %v645 = vadd.f32 0.0, %v644
      %v646 = vpop.f32.mrb[0].mxu0
      %647 = vmatprep.mubr.bf16.mxu0 0
      %648 = vmatmul.mubr.bf16.gmra.mrb[0].mxu0 %v563
      %v649 = vpop.f32.mrb[0].mxu0
      %v650 = vadd.f32 0.0, %v649
      %v651 = vpop.f32.mrb[0].mxu0
      %v652 = vpop.f32.mrb[0].mxu0
      %v653 = vadd.f32 0.0, %v652
      %v654 = vpop.f32.mrb[0].mxu0
      %655 = vmatprep.mubr.bf16.mxu0 0
      %656 = vmatmul.mubr.bf16.gmra.mrb[0].mxu0 %v566
      %v657 = vpop.f32.mrb[0].mxu0
      %v658 = vadd.f32 0.0, %v657
      %v659 = vpop.f32.mrb[0].mxu0
      %v660 = vpop.f32.mrb[0].mxu0
      %v661 = vadd.f32 0.0, %v660
      %v662 = vpop.f32.mrb[0].mxu0
      %663 = vmatprep.mubr.bf16.mxu0 0
      %664 = vmatmul.mubr.bf16.gmra.mrb[0].mxu0 %v569
      %v665 = vpop.f32.mrb[0].mxu0
      %v666 = vadd.f32 0.0, %v665
      %v667 = vpop.f32.mrb[0].mxu0
      %v668 = vpop.f32.mrb[0].mxu0
      %v669 = vadd.f32 0.0, %v668
      %v670 = vpop.f32.mrb[0].mxu0
      %671 = vdwg.mxu0
      %v688 = vunpack.c.l.b16 %v250
      %v689 = vunpack.c.l.b16 %v251
      %v690 = vunpack.c.l.b16 %v252
      %v691 = vunpack.c.l.b16 %v253
      %v692 = vunpack.c.l.b16 %v254
      %v693 = vunpack.c.l.b16 %v255
      %v694 = vunpack.c.l.b16 %v256
      %v695 = vunpack.c.l.b16 %v257
      %v696 = vunpack.c.l.b16 %v258
      %v697 = vunpack.c.l.b16 %v259
      %v698 = vunpack.c.l.b16 %v260
      %v699 = vunpack.c.l.b16 %v261
      %v700 = vunpack.c.l.b16 %v262
      %v701 = vunpack.c.l.b16 %v263
      %v702 = vunpack.c.l.b16 %v264
      %v703 = vunpack.c.l.b16 %v265
      %v704 = vpack.c.b16 %v689, %v688
      %v705 = vpack.c.b16 %v691, %v690
      %v706 = vpack.c.b16 %v693, %v692
      %v707 = vpack.c.b16 %v695, %v694
      %v708 = vpack.c.b16 %v697, %v696
      %v709 = vpack.c.b16 %v699, %v698
      %v710 = vpack.c.b16 %v701, %v700
      %v711 = vpack.c.b16 %v703, %v702
      %v713 = vsel %vm546, %v704, 0
      %v716 = vsel %vm546, %v705, 0
      %v719 = vsel %vm546, %v706, 0
      %v722 = vsel %vm546, %v707, 0
      %v725 = vsel %vm546, %v708, 0
      %v728 = vsel %vm546, %v709, 0
      %v731 = vsel %vm546, %v710, 0
      %v734 = vsel %vm546, %v711, 0
      %v737 = vsel %vm571, %v324, 0
      %739 = vmatprep.subr.bf16.mxu0 0
      %740 = vmatpush1.bf16.msra.mxu0 %v737
      %741 = vmatprep.subr.bf16.mxu0 0
      %742 = vmatpush1.bf16.msra.mxu0 0
      %743 = vmatprep.subr.bf16.mxu0 0
      %744 = vmatpush1.bf16.msra.mxu0 0
      %745 = vmatprep.subr.bf16.mxu0 0
      %746 = vmatpush1.bf16.msra.mxu0 0
      %747 = vmatprep.subr.bf16.mxu0 0
      %748 = vmatpush1.bf16.msra.mxu0 0
      %749 = vmatprep.subr.bf16.mxu0 0
      %750 = vmatpush1.bf16.msra.mxu0 0
      %751 = vmatprep.subr.bf16.mxu0 0
      %752 = vmatpush1.bf16.msra.mxu0 0
      %753 = vmatprep.subr.bf16.mxu0 0
      %754 = vmatpush1.bf16.msra.mxu0 0
      %755 = vmatprep.subr.bf16.mxu0 0
      %756 = vmatpush1.bf16.msra.mxu0 0
      %757 = vmatprep.subr.bf16.mxu0 0
      %758 = vmatpush1.bf16.msra.mxu0 0
      %759 = vmatprep.subr.bf16.mxu0 0
      %760 = vmatpush1.bf16.msra.mxu0 0
      %761 = vmatprep.subr.bf16.mxu0 0
      %762 = vmatpush1.bf16.msra.mxu0 0
      %763 = vmatprep.subr.bf16.mxu0 0
      %764 = vmatpush1.bf16.msra.mxu0 0
      %765 = vmatprep.subr.bf16.mxu0 0
      %766 = vmatpush1.bf16.msra.mxu0 0
      %767 = vmatprep.subr.bf16.mxu0 0
      %768 = vmatpush1.bf16.msra.mxu0 0
      %769 = vmatprep.subr.bf16.mxu0 0
      %770 = vmatpush1.bf16.msra.mxu0 0
      %771 = vmatprep.mubr.bf16.mxu0 0
      %772 = vmatmul.mubr.bf16.gmra.mrb[0].mxu0 %v713
      %v773 = vpop.f32.mrb[0].mxu0
      %v774 = vadd.f32 %v610, %v773
      %v775 = vpop.f32.mrb[0].mxu0
      %v776 = vpop.f32.mrb[0].mxu0
      %v777 = vadd.f32 %v613, %v776
      %v778 = vpop.f32.mrb[0].mxu0
      %779 = vmatprep.mubr.bf16.mxu0 0
      %780 = vmatmul.mubr.bf16.gmra.mrb[0].mxu0 %v716
      %v781 = vpop.f32.mrb[0].mxu0
      %v782 = vadd.f32 %v618, %v781
      %v783 = vpop.f32.mrb[0].mxu0
      %v784 = vpop.f32.mrb[0].mxu0
      %v785 = vadd.f32 %v621, %v784
      %v786 = vpop.f32.mrb[0].mxu0
      %787 = vmatprep.mubr.bf16.mxu0 0
      %788 = vmatmul.mubr.bf16.gmra.mrb[0].mxu0 %v719
      %v789 = vpop.f32.mrb[0].mxu0
      %v790 = vadd.f32 %v626, %v789
      %v791 = vpop.f32.mrb[0].mxu0
      %v792 = vpop.f32.mrb[0].mxu0
      %v793 = vadd.f32 %v629, %v792
      %v794 = vpop.f32.mrb[0].mxu0
      %795 = vmatprep.mubr.bf16.mxu0 0
      %796 = vmatmul.mubr.bf16.gmra.mrb[0].mxu0 %v722
      %v797 = vpop.f32.mrb[0].mxu0
      %v798 = vadd.f32 %v634, %v797
      %v799 = vpop.f32.mrb[0].mxu0
      %v800 = vpop.f32.mrb[0].mxu0
      %v801 = vadd.f32 %v637, %v800
      %v802 = vpop.f32.mrb[0].mxu0
      %803 = vmatprep.mubr.bf16.mxu0 0
      %804 = vmatmul.mubr.bf16.gmra.mrb[0].mxu0 %v725
      %v805 = vpop.f32.mrb[0].mxu0
      %v806 = vadd.f32 %v642, %v805
      %v807 = vpop.f32.mrb[0].mxu0
      %v808 = vpop.f32.mrb[0].mxu0
      %v809 = vadd.f32 %v645, %v808
      %v810 = vpop.f32.mrb[0].mxu0
      %811 = vmatprep.mubr.bf16.mxu0 0
      %812 = vmatmul.mubr.bf16.gmra.mrb[0].mxu0 %v728
      %v813 = vpop.f32.mrb[0].mxu0
      %v814 = vadd.f32 %v650, %v813
      %v815 = vpop.f32.mrb[0].mxu0
      %v816 = vpop.f32.mrb[0].mxu0
      %v817 = vadd.f32 %v653, %v816
      %v818 = vpop.f32.mrb[0].mxu0
      %819 = vmatprep.mubr.bf16.mxu0 0
      %820 = vmatmul.mubr.bf16.gmra.mrb[0].mxu0 %v731
      %v821 = vpop.f32.mrb[0].mxu0
      %v822 = vadd.f32 %v658, %v821
      %v823 = vpop.f32.mrb[0].mxu0
      %v824 = vpop.f32.mrb[0].mxu0
      %v825 = vadd.f32 %v661, %v824
      %v826 = vpop.f32.mrb[0].mxu0
      %827 = vmatprep.mubr.bf16.mxu0 0
      %828 = vmatmul.mubr.bf16.gmra.mrb[0].mxu0 %v734
      %v829 = vpop.f32.mrb[0].mxu0
      %v830 = vadd.f32 %v666, %v829
      %v831 = vpop.f32.mrb[0].mxu0
      %v832 = vpop.f32.mrb[0].mxu0
      %v833 = vadd.f32 %v669, %v832
      %v834 = vpop.f32.mrb[0].mxu0
      %835 = vdwg.mxu0
      %s836 = scalar_lea.vmem %s231, 8
      %v837 = vld [vmem:[%s836] sm:$0xf]
      %v854 = vunpack.c.l.b16 %v275
      %v855 = vunpack.c.l.b16 %v276
      %v856 = vunpack.c.l.b16 %v277
      %v857 = vunpack.c.l.b16 %v278
      %v858 = vunpack.c.l.b16 %v279
      %v859 = vunpack.c.l.b16 %v280
      %v860 = vunpack.c.l.b16 %v281
      %v861 = vunpack.c.l.b16 %v282
      %v862 = vunpack.c.l.b16 %v283
      %v863 = vunpack.c.l.b16 %v284
      %v864 = vunpack.c.l.b16 %v285
      %v865 = vunpack.c.l.b16 %v286
      %v866 = vunpack.c.l.b16 %v287
      %v867 = vunpack.c.l.b16 %v288
      %v868 = vunpack.c.l.b16 %v289
      %v869 = vunpack.c.l.b16 %v290
      %v870 = vpack.c.b16 %v855, %v854
      %v871 = vpack.c.b16 %v857, %v856
      %v872 = vpack.c.b16 %v859, %v858
      %v873 = vpack.c.b16 %v861, %v860
      %v874 = vpack.c.b16 %v863, %v862
      %v875 = vpack.c.b16 %v865, %v864
      %v876 = vpack.c.b16 %v867, %v866
      %v877 = vpack.c.b16 %v869, %v868
      %v879 = vsel %vm546, %v870, 0
      %v882 = vsel %vm546, %v871, 0
      %v885 = vsel %vm546, %v872, 0
      %v888 = vsel %vm546, %v873, 0
      %v891 = vsel %vm546, %v874, 0
      %v894 = vsel %vm546, %v875, 0
      %v897 = vsel %vm546, %v876, 0
      %v900 = vsel %vm546, %v877, 0
      %v903 = vsel %vm571, %v837, 0
      %905 = vmatprep.subr.bf16.mxu0 0
      %906 = vmatpush1.bf16.msra.mxu0 %v903
      %907 = vmatprep.subr.bf16.mxu0 0
      %908 = vmatpush1.bf16.msra.mxu0 0
      %909 = vmatprep.subr.bf16.mxu0 0
      %910 = vmatpush1.bf16.msra.mxu0 0
      %911 = vmatprep.subr.bf16.mxu0 0
      %912 = vmatpush1.bf16.msra.mxu0 0
      %913 = vmatprep.subr.bf16.mxu0 0
      %914 = vmatpush1.bf16.msra.mxu0 0
      %915 = vmatprep.subr.bf16.mxu0 0
      %916 = vmatpush1.bf16.msra.mxu0 0
      %917 = vmatprep.subr.bf16.mxu0 0
      %918 = vmatpush1.bf16.msra.mxu0 0
      %919 = vmatprep.subr.bf16.mxu0 0
      %920 = vmatpush1.bf16.msra.mxu0 0
      %921 = vmatprep.subr.bf16.mxu0 0
      %922 = vmatpush1.bf16.msra.mxu0 0
      %923 = vmatprep.subr.bf16.mxu0 0
      %924 = vmatpush1.bf16.msra.mxu0 0
      %925 = vmatprep.subr.bf16.mxu0 0
      %926 = vmatpush1.bf16.msra.mxu0 0
      %927 = vmatprep.subr.bf16.mxu0 0
      %928 = vmatpush1.bf16.msra.mxu0 0
      %929 = vmatprep.subr.bf16.mxu0 0
      %930 = vmatpush1.bf16.msra.mxu0 0
      %931 = vmatprep.subr.bf16.mxu0 0
      %932 = vmatpush1.bf16.msra.mxu0 0
      %933 = vmatprep.subr.bf16.mxu0 0
      %934 = vmatpush1.bf16.msra.mxu0 0
      %935 = vmatprep.subr.bf16.mxu0 0
      %936 = vmatpush1.bf16.msra.mxu0 0
      %937 = vmatprep.mubr.bf16.mxu0 0
      %938 = vmatmul.mubr.bf16.gmra.mrb[0].mxu0 %v879
      %v939 = vpop.f32.mrb[0].mxu0
      %v940 = vadd.f32 0.0, %v939
      %v941 = vpop.f32.mrb[0].mxu0
      %v942 = vpop.f32.mrb[0].mxu0
      %v943 = vadd.f32 0.0, %v942
      %v944 = vpop.f32.mrb[0].mxu0
      %945 = vmatprep.mubr.bf16.mxu0 0
      %946 = vmatmul.mubr.bf16.gmra.mrb[0].mxu0 %v882
      %v947 = vpop.f32.mrb[0].mxu0
      %v948 = vadd.f32 0.0, %v947
      %v949 = vpop.f32.mrb[0].mxu0
      %v950 = vpop.f32.mrb[0].mxu0
      %v951 = vadd.f32 0.0, %v950
      %v952 = vpop.f32.mrb[0].mxu0
      %953 = vmatprep.mubr.bf16.mxu0 0
      %954 = vmatmul.mubr.bf16.gmra.mrb[0].mxu0 %v885
      %v955 = vpop.f32.mrb[0].mxu0
      %v956 = vadd.f32 0.0, %v955
      %v957 = vpop.f32.mrb[0].mxu0
      %v958 = vpop.f32.mrb[0].mxu0
      %v959 = vadd.f32 0.0, %v958
      %v960 = vpop.f32.mrb[0].mxu0
      %961 = vmatprep.mubr.bf16.mxu0 0
      %962 = vmatmul.mubr.bf16.gmra.mrb[0].mxu0 %v888
      %v963 = vpop.f32.mrb[0].mxu0
      %v964 = vadd.f32 0.0, %v963
      %v965 = vpop.f32.mrb[0].mxu0
      %v966 = vpop.f32.mrb[0].mxu0
      %v967 = vadd.f32 0.0, %v966
      %v968 = vpop.f32.mrb[0].mxu0
      %969 = vmatprep.mubr.bf16.mxu0 0
      %970 = vmatmul.mubr.bf16.gmra.mrb[0].mxu0 %v891
      %v971 = vpop.f32.mrb[0].mxu0
      %v972 = vadd.f32 0.0, %v971
      %v973 = vpop.f32.mrb[0].mxu0
      %v974 = vpop.f32.mrb[0].mxu0
      %v975 = vadd.f32 0.0, %v974
      %v976 = vpop.f32.mrb[0].mxu0
      %977 = vmatprep.mubr.bf16.mxu0 0
      %978 = vmatmul.mubr.bf16.gmra.mrb[0].mxu0 %v894
      %v979 = vpop.f32.mrb[0].mxu0
      %v980 = vadd.f32 0.0, %v979
      %v981 = vpop.f32.mrb[0].mxu0
      %v982 = vpop.f32.mrb[0].mxu0
      %v983 = vadd.f32 0.0, %v982
      %v984 = vpop.f32.mrb[0].mxu0
      %985 = vmatprep.mubr.bf16.mxu0 0
      %986 = vmatmul.mubr.bf16.gmra.mrb[0].mxu0 %v897
      %v987 = vpop.f32.mrb[0].mxu0
      %v988 = vadd.f32 0.0, %v987
      %v989 = vpop.f32.mrb[0].mxu0
      %v990 = vpop.f32.mrb[0].mxu0
      %v991 = vadd.f32 0.0, %v990
      %v992 = vpop.f32.mrb[0].mxu0
      %993 = vmatprep.mubr.bf16.mxu0 0
      %994 = vmatmul.mubr.bf16.gmra.mrb[0].mxu0 %v900
      %v995 = vpop.f32.mrb[0].mxu0
      %v996 = vadd.f32 0.0, %v995
      %v997 = vpop.f32.mrb[0].mxu0
      %v998 = vpop.f32.mrb[0].mxu0
      %v999 = vadd.f32 0.0, %v998
      %v1000 = vpop.f32.mrb[0].mxu0
      %1001 = vdwg.mxu0
      %v1002 = vadd.f32 %v774, %v940
      %v1003 = vadd.f32 %v777, %v943
      %v1004 = vadd.f32 %v782, %v948
      %v1005 = vadd.f32 %v785, %v951
      %v1006 = vadd.f32 %v790, %v956
      %v1007 = vadd.f32 %v793, %v959
      %v1008 = vadd.f32 %v798, %v964
      %v1009 = vadd.f32 %v801, %v967
      %v1010 = vadd.f32 %v806, %v972
      %v1011 = vadd.f32 %v809, %v975
      %v1012 = vadd.f32 %v814, %v980
      %v1013 = vadd.f32 %v817, %v983
      %v1014 = vadd.f32 %v822, %v988
      %v1015 = vadd.f32 %v825, %v991
      %v1016 = vadd.f32 %v830, %v996
      %v1017 = vadd.f32 %v833, %v999
      %v1019 = vshrl.u32 %v275, 16
      %v1021 = vrot.slane %v1019, 4
      %v1022 = vshll.u32 %v275, 16
      %v1024 = vrot.slane %v1022, 5
      %v1025 = vor.u32 %v1021, %v1024
      %v1026 = vrot.slane %v1025, 4
      %v1028 = vshll.u32 %v276, 16
      %v1030 = vrot.slane %v1028, 5
      %v1031 = vsel %vm327, %v1026, %v1030
      %v1032 = vshrl.u32 %v276, 16
      %v1034 = vrot.slane %v1032, 4
      %v1035 = vor.u32 %v1034, %v1030
      %v1036 = vrot.slane %v1035, 4
      %v1038 = vshll.u32 %v291, 16
      %v1040 = vrot.slane %v1038, 5
      %v1041 = vsel %vm327, %v1036, %v1040
      %v1043 = vshrl.u32 %v277, 16
      %v1045 = vrot.slane %v1043, 4
      %v1046 = vshll.u32 %v277, 16
      %v1048 = vrot.slane %v1046, 5
      %v1049 = vor.u32 %v1045, %v1048
      %v1050 = vrot.slane %v1049, 4
      %v1052 = vshll.u32 %v278, 16
      %v1054 = vrot.slane %v1052, 5
      %v1055 = vsel %vm327, %v1050, %v1054
      %v1056 = vshrl.u32 %v278, 16
      %v1058 = vrot.slane %v1056, 4
      %v1059 = vor.u32 %v1058, %v1054
      %v1060 = vrot.slane %v1059, 4
      %v1062 = vshll.u32 %v292, 16
      %v1064 = vrot.slane %v1062, 5
      %v1065 = vsel %vm327, %v1060, %v1064
      %v1067 = vshrl.u32 %v279, 16
      %v1069 = vrot.slane %v1067, 4
      %v1070 = vshll.u32 %v279, 16
      %v1072 = vrot.slane %v1070, 5
      %v1073 = vor.u32 %v1069, %v1072
      %v1074 = vrot.slane %v1073, 4
      %v1076 = vshll.u32 %v280, 16
      %v1078 = vrot.slane %v1076, 5
      %v1079 = vsel %vm327, %v1074, %v1078
      %v1080 = vshrl.u32 %v280, 16
      %v1082 = vrot.slane %v1080, 4
      %v1083 = vor.u32 %v1082, %v1078
      %v1084 = vrot.slane %v1083, 4
      %v1086 = vshll.u32 %v293, 16
      %v1088 = vrot.slane %v1086, 5
      %v1089 = vsel %vm327, %v1084, %v1088
      %v1091 = vshrl.u32 %v281, 16
      %v1093 = vrot.slane %v1091, 4
      %v1094 = vshll.u32 %v281, 16
      %v1096 = vrot.slane %v1094, 5
      %v1097 = vor.u32 %v1093, %v1096
      %v1098 = vrot.slane %v1097, 4
      %v1100 = vshll.u32 %v282, 16
      %v1102 = vrot.slane %v1100, 5
      %v1103 = vsel %vm327, %v1098, %v1102
      %v1104 = vshrl.u32 %v282, 16
      %v1106 = vrot.slane %v1104, 4
      %v1107 = vor.u32 %v1106, %v1102
      %v1108 = vrot.slane %v1107, 4
      %v1110 = vshll.u32 %v294, 16
      %v1112 = vrot.slane %v1110, 5
      %v1113 = vsel %vm327, %v1108, %v1112
      %v1115 = vshrl.u32 %v283, 16
      %v1117 = vrot.slane %v1115, 4
      %v1118 = vshll.u32 %v283, 16
      %v1120 = vrot.slane %v1118, 5
      %v1121 = vor.u32 %v1117, %v1120
      %v1122 = vrot.slane %v1121, 4
      %v1124 = vshll.u32 %v284, 16
      %v1126 = vrot.slane %v1124, 5
      %v1127 = vsel %vm327, %v1122, %v1126
      %v1128 = vshrl.u32 %v284, 16
      %v1130 = vrot.slane %v1128, 4
      %v1131 = vor.u32 %v1130, %v1126
      %v1132 = vrot.slane %v1131, 4
      %v1134 = vshll.u32 %v295, 16
      %v1136 = vrot.slane %v1134, 5
      %v1137 = vsel %vm327, %v1132, %v1136
      %v1139 = vshrl.u32 %v285, 16
      %v1141 = vrot.slane %v1139, 4
      %v1142 = vshll.u32 %v285, 16
      %v1144 = vrot.slane %v1142, 5
      %v1145 = vor.u32 %v1141, %v1144
      %v1146 = vrot.slane %v1145, 4
      %v1148 = vshll.u32 %v286, 16
      %v1150 = vrot.slane %v1148, 5
      %v1151 = vsel %vm327, %v1146, %v1150
      %v1152 = vshrl.u32 %v286, 16
      %v1154 = vrot.slane %v1152, 4
      %v1155 = vor.u32 %v1154, %v1150
      %v1156 = vrot.slane %v1155, 4
      %v1158 = vshll.u32 %v296, 16
      %v1160 = vrot.slane %v1158, 5
      %v1161 = vsel %vm327, %v1156, %v1160
      %v1163 = vshrl.u32 %v287, 16
      %v1165 = vrot.slane %v1163, 4
      %v1166 = vshll.u32 %v287, 16
      %v1168 = vrot.slane %v1166, 5
      %v1169 = vor.u32 %v1165, %v1168
      %v1170 = vrot.slane %v1169, 4
      %v1172 = vshll.u32 %v288, 16
      %v1174 = vrot.slane %v1172, 5
      %v1175 = vsel %vm327, %v1170, %v1174
      %v1176 = vshrl.u32 %v288, 16
      %v1178 = vrot.slane %v1176, 4
      %v1179 = vor.u32 %v1178, %v1174
      %v1180 = vrot.slane %v1179, 4
      %v1182 = vshll.u32 %v297, 16
      %v1184 = vrot.slane %v1182, 5
      %v1185 = vsel %vm327, %v1180, %v1184
      %v1187 = vshrl.u32 %v289, 16
      %v1189 = vrot.slane %v1187, 4
      %v1190 = vshll.u32 %v289, 16
      %v1192 = vrot.slane %v1190, 5
      %v1193 = vor.u32 %v1189, %v1192
      %v1194 = vrot.slane %v1193, 4
      %v1196 = vshll.u32 %v290, 16
      %v1198 = vrot.slane %v1196, 5
      %v1199 = vsel %vm327, %v1194, %v1198
      %v1200 = vshrl.u32 %v290, 16
      %v1202 = vrot.slane %v1200, 4
      %v1203 = vor.u32 %v1202, %v1198
      %v1204 = vrot.slane %v1203, 4
      %v1206 = vshll.u32 %v298, 16
      %v1208 = vrot.slane %v1206, 5
      %v1209 = vsel %vm327, %v1204, %v1208
      %s1210 = scalar_lea.vmem %s231, 12
      %v1211 = vld [vmem:[%s1210] sm:$0xf]
      %v1212 = vunpack.c.l.b16 %v1031
      %v1213 = vunpack.c.l.b16 %v1041
      %v1214 = vunpack.c.l.b16 %v1055
      %v1215 = vunpack.c.l.b16 %v1065
      %v1216 = vunpack.c.l.b16 %v1079
      %v1217 = vunpack.c.l.b16 %v1089
      %v1218 = vunpack.c.l.b16 %v1103
      %v1219 = vunpack.c.l.b16 %v1113
      %v1220 = vunpack.c.l.b16 %v1127
      %v1221 = vunpack.c.l.b16 %v1137
      %v1222 = vunpack.c.l.b16 %v1151
      %v1223 = vunpack.c.l.b16 %v1161
      %v1224 = vunpack.c.l.b16 %v1175
      %v1225 = vunpack.c.l.b16 %v1185
      %v1226 = vunpack.c.l.b16 %v1199
      %v1227 = vunpack.c.l.b16 %v1209
      %v1228 = vpack.c.b16 %v1213, %v1212
      %v1229 = vpack.c.b16 %v1215, %v1214
      %v1230 = vpack.c.b16 %v1217, %v1216
      %v1231 = vpack.c.b16 %v1219, %v1218
      %v1232 = vpack.c.b16 %v1221, %v1220
      %v1233 = vpack.c.b16 %v1223, %v1222
      %v1234 = vpack.c.b16 %v1225, %v1224
      %v1235 = vpack.c.b16 %v1227, %v1226
      %v1237 = vsel %vm546, %v1228, 0
      %v1240 = vsel %vm546, %v1229, 0
      %v1243 = vsel %vm546, %v1230, 0
      %v1246 = vsel %vm546, %v1231, 0
      %v1249 = vsel %vm546, %v1232, 0
      %v1252 = vsel %vm546, %v1233, 0
      %v1255 = vsel %vm546, %v1234, 0
      %v1258 = vsel %vm546, %v1235, 0
      %v1261 = vsel %vm571, %v1211, 0
      %1263 = vmatprep.subr.bf16.mxu0 0
      %1264 = vmatpush1.bf16.msra.mxu0 %v1261
      %1265 = vmatprep.subr.bf16.mxu0 0
      %1266 = vmatpush1.bf16.msra.mxu0 0
      %1267 = vmatprep.subr.bf16.mxu0 0
      %1268 = vmatpush1.bf16.msra.mxu0 0
      %1269 = vmatprep.subr.bf16.mxu0 0
      %1270 = vmatpush1.bf16.msra.mxu0 0
      %1271 = vmatprep.subr.bf16.mxu0 0
      %1272 = vmatpush1.bf16.msra.mxu0 0
      %1273 = vmatprep.subr.bf16.mxu0 0
      %1274 = vmatpush1.bf16.msra.mxu0 0
      %1275 = vmatprep.subr.bf16.mxu0 0
      %1276 = vmatpush1.bf16.msra.mxu0 0
      %1277 = vmatprep.subr.bf16.mxu0 0
      %1278 = vmatpush1.bf16.msra.mxu0 0
      %1279 = vmatprep.subr.bf16.mxu0 0
      %1280 = vmatpush1.bf16.msra.mxu0 0
      %1281 = vmatprep.subr.bf16.mxu0 0
      %1282 = vmatpush1.bf16.msra.mxu0 0
      %1283 = vmatprep.subr.bf16.mxu0 0
      %1284 = vmatpush1.bf16.msra.mxu0 0
      %1285 = vmatprep.subr.bf16.mxu0 0
      %1286 = vmatpush1.bf16.msra.mxu0 0
      %1287 = vmatprep.subr.bf16.mxu0 0
      %1288 = vmatpush1.bf16.msra.mxu0 0
      %1289 = vmatprep.subr.bf16.mxu0 0
      %1290 = vmatpush1.bf16.msra.mxu0 0
      %1291 = vmatprep.subr.bf16.mxu0 0
      %1292 = vmatpush1.bf16.msra.mxu0 0
      %1293 = vmatprep.subr.bf16.mxu0 0
      %1294 = vmatpush1.bf16.msra.mxu0 0
      %1295 = vmatprep.mubr.bf16.mxu0 0
      %1296 = vmatmul.mubr.bf16.gmra.mrb[0].mxu0 %v1237
      %v1297 = vpop.f32.mrb[0].mxu0
      %v1298 = vadd.f32 0.0, %v1297
      %v1299 = vpop.f32.mrb[0].mxu0
      %v1300 = vpop.f32.mrb[0].mxu0
      %v1301 = vadd.f32 0.0, %v1300
      %v1302 = vpop.f32.mrb[0].mxu0
      %1303 = vmatprep.mubr.bf16.mxu0 0
      %1304 = vmatmul.mubr.bf16.gmra.mrb[0].mxu0 %v1240
      %v1305 = vpop.f32.mrb[0].mxu0
      %v1306 = vadd.f32 0.0, %v1305
      %v1307 = vpop.f32.mrb[0].mxu0
      %v1308 = vpop.f32.mrb[0].mxu0
      %v1309 = vadd.f32 0.0, %v1308
      %v1310 = vpop.f32.mrb[0].mxu0
      %1311 = vmatprep.mubr.bf16.mxu0 0
      %1312 = vmatmul.mubr.bf16.gmra.mrb[0].mxu0 %v1243
      %v1313 = vpop.f32.mrb[0].mxu0
      %v1314 = vadd.f32 0.0, %v1313
      %v1315 = vpop.f32.mrb[0].mxu0
      %v1316 = vpop.f32.mrb[0].mxu0
      %v1317 = vadd.f32 0.0, %v1316
      %v1318 = vpop.f32.mrb[0].mxu0
      %1319 = vmatprep.mubr.bf16.mxu0 0
      %1320 = vmatmul.mubr.bf16.gmra.mrb[0].mxu0 %v1246
      %v1321 = vpop.f32.mrb[0].mxu0
      %v1322 = vadd.f32 0.0, %v1321
      %v1323 = vpop.f32.mrb[0].mxu0
      %v1324 = vpop.f32.mrb[0].mxu0
      %v1325 = vadd.f32 0.0, %v1324
      %v1326 = vpop.f32.mrb[0].mxu0
      %1327 = vmatprep.mubr.bf16.mxu0 0
      %1328 = vmatmul.mubr.bf16.gmra.mrb[0].mxu0 %v1249
      %v1329 = vpop.f32.mrb[0].mxu0
      %v1330 = vadd.f32 0.0, %v1329
      %v1331 = vpop.f32.mrb[0].mxu0
      %v1332 = vpop.f32.mrb[0].mxu0
      %v1333 = vadd.f32 0.0, %v1332
      %v1334 = vpop.f32.mrb[0].mxu0
      %1335 = vmatprep.mubr.bf16.mxu0 0
      %1336 = vmatmul.mubr.bf16.gmra.mrb[0].mxu0 %v1252
      %v1337 = vpop.f32.mrb[0].mxu0
      %v1338 = vadd.f32 0.0, %v1337
      %v1339 = vpop.f32.mrb[0].mxu0
      %v1340 = vpop.f32.mrb[0].mxu0
      %v1341 = vadd.f32 0.0, %v1340
      %v1342 = vpop.f32.mrb[0].mxu0
      %1343 = vmatprep.mubr.bf16.mxu0 0
      %1344 = vmatmul.mubr.bf16.gmra.mrb[0].mxu0 %v1255
      %v1345 = vpop.f32.mrb[0].mxu0
      %v1346 = vadd.f32 0.0, %v1345
      %v1347 = vpop.f32.mrb[0].mxu0
      %v1348 = vpop.f32.mrb[0].mxu0
      %v1349 = vadd.f32 0.0, %v1348
      %v1350 = vpop.f32.mrb[0].mxu0
      %1351 = vmatprep.mubr.bf16.mxu0 0
      %1352 = vmatmul.mubr.bf16.gmra.mrb[0].mxu0 %v1258
      %v1353 = vpop.f32.mrb[0].mxu0
      %v1354 = vadd.f32 0.0, %v1353
      %v1355 = vpop.f32.mrb[0].mxu0
      %v1356 = vpop.f32.mrb[0].mxu0
      %v1357 = vadd.f32 0.0, %v1356
      %v1358 = vpop.f32.mrb[0].mxu0
      %1359 = vdwg.mxu0
      %v1360 = vadd.f32 %v1002, %v1298
      %v1361 = vadd.f32 %v1003, %v1301
      %v1362 = vadd.f32 %v1004, %v1306
      %v1363 = vadd.f32 %v1005, %v1309
      %v1364 = vadd.f32 %v1006, %v1314
      %v1365 = vadd.f32 %v1007, %v1317
      %v1366 = vadd.f32 %v1008, %v1322
      %v1367 = vadd.f32 %v1009, %v1325
      %v1368 = vadd.f32 %v1010, %v1330
      %v1369 = vadd.f32 %v1011, %v1333
      %v1370 = vadd.f32 %v1012, %v1338
      %v1371 = vadd.f32 %v1013, %v1341
      %v1372 = vadd.f32 %v1014, %v1346
      %v1373 = vadd.f32 %v1015, %v1349
      %v1374 = vadd.f32 %v1016, %v1354
      %v1375 = vadd.f32 %v1017, %v1357
      %s1376 = scalar_lea.vmem %s231, 16
      %v1377 = vld [vmem:[%s1376] sm:$0xf]
      %v1394 = vunpack.c.l.b16 %v300
      %v1395 = vunpack.c.l.b16 %v301
      %v1396 = vunpack.c.l.b16 %v302
      %v1397 = vunpack.c.l.b16 %v303
      %v1398 = vunpack.c.l.b16 %v304
      %v1399 = vunpack.c.l.b16 %v305
      %v1400 = vunpack.c.l.b16 %v306
      %v1401 = vunpack.c.l.b16 %v307
      %v1402 = vunpack.c.l.b16 %v308
      %v1403 = vunpack.c.l.b16 %v309
      %v1404 = vunpack.c.l.b16 %v310
      %v1405 = vunpack.c.l.b16 %v311
      %v1406 = vunpack.c.l.b16 %v312
      %v1407 = vunpack.c.l.b16 %v313
      %v1408 = vunpack.c.l.b16 %v314
      %v1409 = vunpack.c.l.b16 %v315
      %v1410 = vpack.c.b16 %v1395, %v1394
      %v1411 = vpack.c.b16 %v1397, %v1396
      %v1412 = vpack.c.b16 %v1399, %v1398
      %v1413 = vpack.c.b16 %v1401, %v1400
      %v1414 = vpack.c.b16 %v1403, %v1402
      %v1415 = vpack.c.b16 %v1405, %v1404
      %v1416 = vpack.c.b16 %v1407, %v1406
      %v1417 = vpack.c.b16 %v1409, %v1408
      %v1419 = vsel %vm546, %v1410, 0
      %v1422 = vsel %vm546, %v1411, 0
      %v1425 = vsel %vm546, %v1412, 0
      %v1428 = vsel %vm546, %v1413, 0
      %v1431 = vsel %vm546, %v1414, 0
      %v1434 = vsel %vm546, %v1415, 0
      %v1437 = vsel %vm546, %v1416, 0
      %v1440 = vsel %vm546, %v1417, 0
      %v1443 = vsel %vm571, %v1377, 0
      %1445 = vmatprep.subr.bf16.mxu0 0
      %1446 = vmatpush1.bf16.msra.mxu0 %v1443
      %1447 = vmatprep.subr.bf16.mxu0 0
      %1448 = vmatpush1.bf16.msra.mxu0 0
      %1449 = vmatprep.subr.bf16.mxu0 0
      %1450 = vmatpush1.bf16.msra.mxu0 0
      %1451 = vmatprep.subr.bf16.mxu0 0
      %1452 = vmatpush1.bf16.msra.mxu0 0
      %1453 = vmatprep.subr.bf16.mxu0 0
      %1454 = vmatpush1.bf16.msra.mxu0 0
      %1455 = vmatprep.subr.bf16.mxu0 0
      %1456 = vmatpush1.bf16.msra.mxu0 0
      %1457 = vmatprep.subr.bf16.mxu0 0
      %1458 = vmatpush1.bf16.msra.mxu0 0
      %1459 = vmatprep.subr.bf16.mxu0 0
      %1460 = vmatpush1.bf16.msra.mxu0 0
      %1461 = vmatprep.subr.bf16.mxu0 0
      %1462 = vmatpush1.bf16.msra.mxu0 0
      %1463 = vmatprep.subr.bf16.mxu0 0
      %1464 = vmatpush1.bf16.msra.mxu0 0
      %1465 = vmatprep.subr.bf16.mxu0 0
      %1466 = vmatpush1.bf16.msra.mxu0 0
      %1467 = vmatprep.subr.bf16.mxu0 0
      %1468 = vmatpush1.bf16.msra.mxu0 0
      %1469 = vmatprep.subr.bf16.mxu0 0
      %1470 = vmatpush1.bf16.msra.mxu0 0
      %1471 = vmatprep.subr.bf16.mxu0 0
      %1472 = vmatpush1.bf16.msra.mxu0 0
      %1473 = vmatprep.subr.bf16.mxu0 0
      %1474 = vmatpush1.bf16.msra.mxu0 0
      %1475 = vmatprep.subr.bf16.mxu0 0
      %1476 = vmatpush1.bf16.msra.mxu0 0
      %1477 = vmatprep.mubr.bf16.mxu0 0
      %1478 = vmatmul.mubr.bf16.gmra.mrb[0].mxu0 %v1419
      %v1479 = vpop.f32.mrb[0].mxu0
      %v1480 = vadd.f32 0.0, %v1479
      %v1481 = vpop.f32.mrb[0].mxu0
      %v1482 = vpop.f32.mrb[0].mxu0
      %v1483 = vadd.f32 0.0, %v1482
      %v1484 = vpop.f32.mrb[0].mxu0
      %1485 = vmatprep.mubr.bf16.mxu0 0
      %1486 = vmatmul.mubr.bf16.gmra.mrb[0].mxu0 %v1422
      %v1487 = vpop.f32.mrb[0].mxu0
      %v1488 = vadd.f32 0.0, %v1487
      %v1489 = vpop.f32.mrb[0].mxu0
      %v1490 = vpop.f32.mrb[0].mxu0
      %v1491 = vadd.f32 0.0, %v1490
      %v1492 = vpop.f32.mrb[0].mxu0
      %1493 = vmatprep.mubr.bf16.mxu0 0
      %1494 = vmatmul.mubr.bf16.gmra.mrb[0].mxu0 %v1425
      %v1495 = vpop.f32.mrb[0].mxu0
      %v1496 = vadd.f32 0.0, %v1495
      %v1497 = vpop.f32.mrb[0].mxu0
      %v1498 = vpop.f32.mrb[0].mxu0
      %v1499 = vadd.f32 0.0, %v1498
      %v1500 = vpop.f32.mrb[0].mxu0
      %1501 = vmatprep.mubr.bf16.mxu0 0
      %1502 = vmatmul.mubr.bf16.gmra.mrb[0].mxu0 %v1428
      %v1503 = vpop.f32.mrb[0].mxu0
      %v1504 = vadd.f32 0.0, %v1503
      %v1505 = vpop.f32.mrb[0].mxu0
      %v1506 = vpop.f32.mrb[0].mxu0
      %v1507 = vadd.f32 0.0, %v1506
      %v1508 = vpop.f32.mrb[0].mxu0
      %1509 = vmatprep.mubr.bf16.mxu0 0
      %1510 = vmatmul.mubr.bf16.gmra.mrb[0].mxu0 %v1431
      %v1511 = vpop.f32.mrb[0].mxu0
      %v1512 = vadd.f32 0.0, %v1511
      %v1513 = vpop.f32.mrb[0].mxu0
      %v1514 = vpop.f32.mrb[0].mxu0
      %v1515 = vadd.f32 0.0, %v1514
      %v1516 = vpop.f32.mrb[0].mxu0
      %1517 = vmatprep.mubr.bf16.mxu0 0
      %1518 = vmatmul.mubr.bf16.gmra.mrb[0].mxu0 %v1434
      %v1519 = vpop.f32.mrb[0].mxu0
      %v1520 = vadd.f32 0.0, %v1519
      %v1521 = vpop.f32.mrb[0].mxu0
      %v1522 = vpop.f32.mrb[0].mxu0
      %v1523 = vadd.f32 0.0, %v1522
      %v1524 = vpop.f32.mrb[0].mxu0
      %1525 = vmatprep.mubr.bf16.mxu0 0
      %1526 = vmatmul.mubr.bf16.gmra.mrb[0].mxu0 %v1437
      %v1527 = vpop.f32.mrb[0].mxu0
      %v1528 = vadd.f32 0.0, %v1527
      %v1529 = vpop.f32.mrb[0].mxu0
      %v1530 = vpop.f32.mrb[0].mxu0
      %v1531 = vadd.f32 0.0, %v1530
      %v1532 = vpop.f32.mrb[0].mxu0
      %1533 = vmatprep.mubr.bf16.mxu0 0
      %1534 = vmatmul.mubr.bf16.gmra.mrb[0].mxu0 %v1440
      %v1535 = vpop.f32.mrb[0].mxu0
      %v1536 = vadd.f32 0.0, %v1535
      %v1537 = vpop.f32.mrb[0].mxu0
      %v1538 = vpop.f32.mrb[0].mxu0
      %v1539 = vadd.f32 0.0, %v1538
      %v1540 = vpop.f32.mrb[0].mxu0
      %1541 = vdwg.mxu0
      %v1542 = vadd.f32 %v1360, %v1480
      %v1543 = vadd.f32 %v1361, %v1483
      %v1544 = vadd.f32 %v1362, %v1488
      %v1545 = vadd.f32 %v1363, %v1491
      %v1546 = vadd.f32 %v1364, %v1496
      %v1547 = vadd.f32 %v1365, %v1499
      %v1548 = vadd.f32 %v1366, %v1504
      %v1549 = vadd.f32 %v1367, %v1507
      %v1550 = vadd.f32 %v1368, %v1512
      %v1551 = vadd.f32 %v1369, %v1515
      %v1552 = vadd.f32 %v1370, %v1520
      %v1553 = vadd.f32 %v1371, %v1523
      %v1554 = vadd.f32 %v1372, %v1528
      %v1555 = vadd.f32 %v1373, %v1531
      %v1556 = vadd.f32 %v1374, %v1536
      %v1557 = vadd.f32 %v1375, %v1539
      %v1559 = vshrl.u32 %v300, 16
      %v1561 = vrot.slane %v1559, 4
      %v1562 = vshll.u32 %v300, 16
      %v1564 = vrot.slane %v1562, 5
      %v1565 = vor.u32 %v1561, %v1564
      %v1566 = vrot.slane %v1565, 4
      %v1568 = vshll.u32 %v301, 16
      %v1570 = vrot.slane %v1568, 5
      %v1571 = vsel %vm327, %v1566, %v1570
      %v1572 = vshrl.u32 %v301, 16
      %v1574 = vrot.slane %v1572, 4
      %v1575 = vor.u32 %v1574, %v1570
      %v1576 = vrot.slane %v1575, 4
      %v1578 = vshll.u32 %v316, 16
      %v1580 = vrot.slane %v1578, 5
      %v1581 = vsel %vm327, %v1576, %v1580
      %v1583 = vshrl.u32 %v302, 16
      %v1585 = vrot.slane %v1583, 4
      %v1586 = vshll.u32 %v302, 16
      %v1588 = vrot.slane %v1586, 5
      %v1589 = vor.u32 %v1585, %v1588
      %v1590 = vrot.slane %v1589, 4
      %v1592 = vshll.u32 %v303, 16
      %v1594 = vrot.slane %v1592, 5
      %v1595 = vsel %vm327, %v1590, %v1594
      %v1596 = vshrl.u32 %v303, 16
      %v1598 = vrot.slane %v1596, 4
      %v1599 = vor.u32 %v1598, %v1594
      %v1600 = vrot.slane %v1599, 4
      %v1602 = vshll.u32 %v317, 16
      %v1604 = vrot.slane %v1602, 5
      %v1605 = vsel %vm327, %v1600, %v1604
      %v1607 = vshrl.u32 %v304, 16
      %v1609 = vrot.slane %v1607, 4
      %v1610 = vshll.u32 %v304, 16
      %v1612 = vrot.slane %v1610, 5
      %v1613 = vor.u32 %v1609, %v1612
      %v1614 = vrot.slane %v1613, 4
      %v1616 = vshll.u32 %v305, 16
      %v1618 = vrot.slane %v1616, 5
      %v1619 = vsel %vm327, %v1614, %v1618
      %v1620 = vshrl.u32 %v305, 16
      %v1622 = vrot.slane %v1620, 4
      %v1623 = vor.u32 %v1622, %v1618
      %v1624 = vrot.slane %v1623, 4
      %v1626 = vshll.u32 %v318, 16
      %v1628 = vrot.slane %v1626, 5
      %v1629 = vsel %vm327, %v1624, %v1628
      %v1631 = vshrl.u32 %v306, 16
      %v1633 = vrot.slane %v1631, 4
      %v1634 = vshll.u32 %v306, 16
      %v1636 = vrot.slane %v1634, 5
      %v1637 = vor.u32 %v1633, %v1636
      %v1638 = vrot.slane %v1637, 4
      %v1640 = vshll.u32 %v307, 16
      %v1642 = vrot.slane %v1640, 5
      %v1643 = vsel %vm327, %v1638, %v1642
      %v1644 = vshrl.u32 %v307, 16
      %v1646 = vrot.slane %v1644, 4
      %v1647 = vor.u32 %v1646, %v1642
      %v1648 = vrot.slane %v1647, 4
      %v1650 = vshll.u32 %v319, 16
      %v1652 = vrot.slane %v1650, 5
      %v1653 = vsel %vm327, %v1648, %v1652
      %v1655 = vshrl.u32 %v308, 16
      %v1657 = vrot.slane %v1655, 4
      %v1658 = vshll.u32 %v308, 16
      %v1660 = vrot.slane %v1658, 5
      %v1661 = vor.u32 %v1657, %v1660
      %v1662 = vrot.slane %v1661, 4
      %v1664 = vshll.u32 %v309, 16
      %v1666 = vrot.slane %v1664, 5
      %v1667 = vsel %vm327, %v1662, %v1666
      %v1668 = vshrl.u32 %v309, 16
      %v1670 = vrot.slane %v1668, 4
      %v1671 = vor.u32 %v1670, %v1666
      %v1672 = vrot.slane %v1671, 4
      %v1674 = vshll.u32 %v320, 16
      %v1676 = vrot.slane %v1674, 5
      %v1677 = vsel %vm327, %v1672, %v1676
      %v1679 = vshrl.u32 %v310, 16
      %v1681 = vrot.slane %v1679, 4
      %v1682 = vshll.u32 %v310, 16
      %v1684 = vrot.slane %v1682, 5
      %v1685 = vor.u32 %v1681, %v1684
      %v1686 = vrot.slane %v1685, 4
      %v1688 = vshll.u32 %v311, 16
      %v1690 = vrot.slane %v1688, 5
      %v1691 = vsel %vm327, %v1686, %v1690
      %v1692 = vshrl.u32 %v311, 16
      %v1694 = vrot.slane %v1692, 4
      %v1695 = vor.u32 %v1694, %v1690
      %v1696 = vrot.slane %v1695, 4
      %v1698 = vshll.u32 %v321, 16
      %v1700 = vrot.slane %v1698, 5
      %v1701 = vsel %vm327, %v1696, %v1700
      %v1703 = vshrl.u32 %v312, 16
      %v1705 = vrot.slane %v1703, 4
      %v1706 = vshll.u32 %v312, 16
      %v1708 = vrot.slane %v1706, 5
      %v1709 = vor.u32 %v1705, %v1708
      %v1710 = vrot.slane %v1709, 4
      %v1712 = vshll.u32 %v313, 16
      %v1714 = vrot.slane %v1712, 5
      %v1715 = vsel %vm327, %v1710, %v1714
      %v1716 = vshrl.u32 %v313, 16
      %v1718 = vrot.slane %v1716, 4
      %v1719 = vor.u32 %v1718, %v1714
      %v1720 = vrot.slane %v1719, 4
      %v1722 = vshll.u32 %v322, 16
      %v1724 = vrot.slane %v1722, 5
      %v1725 = vsel %vm327, %v1720, %v1724
      %v1727 = vshrl.u32 %v314, 16
      %v1729 = vrot.slane %v1727, 4
      %v1730 = vshll.u32 %v314, 16
      %v1732 = vrot.slane %v1730, 5
      %v1733 = vor.u32 %v1729, %v1732
      %v1734 = vrot.slane %v1733, 4
      %v1736 = vshll.u32 %v315, 16
      %v1738 = vrot.slane %v1736, 5
      %v1739 = vsel %vm327, %v1734, %v1738
      %v1740 = vshrl.u32 %v315, 16
      %v1742 = vrot.slane %v1740, 4
      %v1743 = vor.u32 %v1742, %v1738
      %v1744 = vrot.slane %v1743, 4
      %v1746 = vshll.u32 %v323, 16
      %v1748 = vrot.slane %v1746, 5
      %v1749 = vsel %vm327, %v1744, %v1748
      %s1750 = scalar_lea.vmem %s231, 20
      %v1751 = vld [vmem:[%s1750] sm:$0xf]
      %v1752 = vunpack.c.l.b16 %v1571
      %v1753 = vunpack.c.l.b16 %v1581
      %v1754 = vunpack.c.l.b16 %v1595
      %v1755 = vunpack.c.l.b16 %v1605
      %v1756 = vunpack.c.l.b16 %v1619
      %v1757 = vunpack.c.l.b16 %v1629
      %v1758 = vunpack.c.l.b16 %v1643
      %v1759 = vunpack.c.l.b16 %v1653
      %v1760 = vunpack.c.l.b16 %v1667
      %v1761 = vunpack.c.l.b16 %v1677
      %v1762 = vunpack.c.l.b16 %v1691
      %v1763 = vunpack.c.l.b16 %v1701
      %v1764 = vunpack.c.l.b16 %v1715
      %v1765 = vunpack.c.l.b16 %v1725
      %v1766 = vunpack.c.l.b16 %v1739
      %v1767 = vunpack.c.l.b16 %v1749
      %v1768 = vpack.c.b16 %v1753, %v1752
      %v1769 = vpack.c.b16 %v1755, %v1754
      %v1770 = vpack.c.b16 %v1757, %v1756
      %v1771 = vpack.c.b16 %v1759, %v1758
      %v1772 = vpack.c.b16 %v1761, %v1760
      %v1773 = vpack.c.b16 %v1763, %v1762
      %v1774 = vpack.c.b16 %v1765, %v1764
      %v1775 = vpack.c.b16 %v1767, %v1766
      %v1777 = vsel %vm546, %v1768, 0
      %v1780 = vsel %vm546, %v1769, 0
      %v1783 = vsel %vm546, %v1770, 0
      %v1786 = vsel %vm546, %v1771, 0
      %v1789 = vsel %vm546, %v1772, 0
      %v1792 = vsel %vm546, %v1773, 0
      %v1795 = vsel %vm546, %v1774, 0
      %v1798 = vsel %vm546, %v1775, 0
      %v1801 = vsel %vm571, %v1751, 0
      %1803 = vmatprep.subr.bf16.mxu0 0
      %1804 = vmatpush1.bf16.msra.mxu0 %v1801
      %1805 = vmatprep.subr.bf16.mxu0 0
      %1806 = vmatpush1.bf16.msra.mxu0 0
      %1807 = vmatprep.subr.bf16.mxu0 0
      %1808 = vmatpush1.bf16.msra.mxu0 0
      %1809 = vmatprep.subr.bf16.mxu0 0
      %1810 = vmatpush1.bf16.msra.mxu0 0
      %1811 = vmatprep.subr.bf16.mxu0 0
      %1812 = vmatpush1.bf16.msra.mxu0 0
      %1813 = vmatprep.subr.bf16.mxu0 0
      %1814 = vmatpush1.bf16.msra.mxu0 0
      %1815 = vmatprep.subr.bf16.mxu0 0
      %1816 = vmatpush1.bf16.msra.mxu0 0
      %1817 = vmatprep.subr.bf16.mxu0 0
      %1818 = vmatpush1.bf16.msra.mxu0 0
      %1819 = vmatprep.subr.bf16.mxu0 0
      %1820 = vmatpush1.bf16.msra.mxu0 0
      %1821 = vmatprep.subr.bf16.mxu0 0
      %1822 = vmatpush1.bf16.msra.mxu0 0
      %1823 = vmatprep.subr.bf16.mxu0 0
      %1824 = vmatpush1.bf16.msra.mxu0 0
      %1825 = vmatprep.subr.bf16.mxu0 0
      %1826 = vmatpush1.bf16.msra.mxu0 0
      %1827 = vmatprep.subr.bf16.mxu0 0
      %1828 = vmatpush1.bf16.msra.mxu0 0
      %1829 = vmatprep.subr.bf16.mxu0 0
      %1830 = vmatpush1.bf16.msra.mxu0 0
      %1831 = vmatprep.subr.bf16.mxu0 0
      %1832 = vmatpush1.bf16.msra.mxu0 0
      %1833 = vmatprep.subr.bf16.mxu0 0
      %1834 = vmatpush1.bf16.msra.mxu0 0
      %1835 = vmatprep.mubr.bf16.mxu0 0
      %1836 = vmatmul.mubr.bf16.gmra.mrb[0].mxu0 %v1777
      %v1837 = vpop.f32.mrb[0].mxu0
      %v1838 = vadd.f32 0.0, %v1837
      %v1839 = vpop.f32.mrb[0].mxu0
      %v1840 = vpop.f32.mrb[0].mxu0
      %v1841 = vadd.f32 0.0, %v1840
      %v1842 = vpop.f32.mrb[0].mxu0
      %1843 = vmatprep.mubr.bf16.mxu0 0
      %1844 = vmatmul.mubr.bf16.gmra.mrb[0].mxu0 %v1780
      %v1845 = vpop.f32.mrb[0].mxu0
      %v1846 = vadd.f32 0.0, %v1845
      %v1847 = vpop.f32.mrb[0].mxu0
      %v1848 = vpop.f32.mrb[0].mxu0
      %v1849 = vadd.f32 0.0, %v1848
      %v1850 = vpop.f32.mrb[0].mxu0
      %1851 = vmatprep.mubr.bf16.mxu0 0
      %1852 = vmatmul.mubr.bf16.gmra.mrb[0].mxu0 %v1783
      %v1853 = vpop.f32.mrb[0].mxu0
      %v1854 = vadd.f32 0.0, %v1853
      %v1855 = vpop.f32.mrb[0].mxu0
      %v1856 = vpop.f32.mrb[0].mxu0
      %v1857 = vadd.f32 0.0, %v1856
      %v1858 = vpop.f32.mrb[0].mxu0
      %1859 = vmatprep.mubr.bf16.mxu0 0
      %1860 = vmatmul.mubr.bf16.gmra.mrb[0].mxu0 %v1786
      %v1861 = vpop.f32.mrb[0].mxu0
      %v1862 = vadd.f32 0.0, %v1861
      %v1863 = vpop.f32.mrb[0].mxu0
      %v1864 = vpop.f32.mrb[0].mxu0
      %v1865 = vadd.f32 0.0, %v1864
      %v1866 = vpop.f32.mrb[0].mxu0
      %1867 = vmatprep.mubr.bf16.mxu0 0
      %1868 = vmatmul.mubr.bf16.gmra.mrb[0].mxu0 %v1789
      %v1869 = vpop.f32.mrb[0].mxu0
      %v1870 = vadd.f32 0.0, %v1869
      %v1871 = vpop.f32.mrb[0].mxu0
      %v1872 = vpop.f32.mrb[0].mxu0
      %v1873 = vadd.f32 0.0, %v1872
      %v1874 = vpop.f32.mrb[0].mxu0
      %1875 = vmatprep.mubr.bf16.mxu0 0
      %1876 = vmatmul.mubr.bf16.gmra.mrb[0].mxu0 %v1792
      %v1877 = vpop.f32.mrb[0].mxu0
      %v1878 = vadd.f32 0.0, %v1877
      %v1879 = vpop.f32.mrb[0].mxu0
      %v1880 = vpop.f32.mrb[0].mxu0
      %v1881 = vadd.f32 0.0, %v1880
      %v1882 = vpop.f32.mrb[0].mxu0
      %1883 = vmatprep.mubr.bf16.mxu0 0
      %1884 = vmatmul.mubr.bf16.gmra.mrb[0].mxu0 %v1795
      %v1885 = vpop.f32.mrb[0].mxu0
      %v1886 = vadd.f32 0.0, %v1885
      %v1887 = vpop.f32.mrb[0].mxu0
      %v1888 = vpop.f32.mrb[0].mxu0
      %v1889 = vadd.f32 0.0, %v1888
      %v1890 = vpop.f32.mrb[0].mxu0
      %1891 = vmatprep.mubr.bf16.mxu0 0
      %1892 = vmatmul.mubr.bf16.gmra.mrb[0].mxu0 %v1798
      %v1893 = vpop.f32.mrb[0].mxu0
      %v1894 = vadd.f32 0.0, %v1893
      %v1895 = vpop.f32.mrb[0].mxu0
      %v1896 = vpop.f32.mrb[0].mxu0
      %v1897 = vadd.f32 0.0, %v1896
      %v1898 = vpop.f32.mrb[0].mxu0
      %1899 = vdwg.mxu0
      %v1900 = vadd.f32 %v1542, %v1838
      %v1901 = vadd.f32 %v1543, %v1841
      %v1902 = vadd.f32 %v1544, %v1846
      %v1903 = vadd.f32 %v1545, %v1849
      %v1904 = vadd.f32 %v1546, %v1854
      %v1905 = vadd.f32 %v1547, %v1857
      %v1906 = vadd.f32 %v1548, %v1862
      %v1907 = vadd.f32 %v1549, %v1865
      %v1908 = vadd.f32 %v1550, %v1870
      %v1909 = vadd.f32 %v1551, %v1873
      %v1910 = vadd.f32 %v1552, %v1878
      %v1911 = vadd.f32 %v1553, %v1881
      %v1912 = vadd.f32 %v1554, %v1886
      %v1913 = vadd.f32 %v1555, %v1889
      %v1914 = vadd.f32 %v1556, %v1894
      %v1915 = vadd.f32 %v1557, %v1897
      %v1916 = vld [vmem:[%s234] sm:$0x1]
      %v1918 = vlaneseq
      %v1919 = vshrl.u32 %v1918, 7
      %v1920 = vsub.s32 0, %v1919
      %v1921 = vrot.slane %v1916, %v1920
      %v1923 = vadd.f32 %v1900, %v1921
      %v1924 = vadd.f32 %v1901, %v1921
      %v1925 = vadd.f32 %v1902, %v1921
      %v1926 = vadd.f32 %v1903, %v1921
      %v1927 = vadd.f32 %v1904, %v1921
      %v1928 = vadd.f32 %v1905, %v1921
      %v1929 = vadd.f32 %v1906, %v1921
      %v1930 = vadd.f32 %v1907, %v1921
      %v1931 = vadd.f32 %v1908, %v1921
      %v1932 = vadd.f32 %v1909, %v1921
      %v1933 = vadd.f32 %v1910, %v1921
      %v1934 = vadd.f32 %v1911, %v1921
      %v1935 = vadd.f32 %v1912, %v1921
      %v1936 = vadd.f32 %v1913, %v1921
      %v1937 = vadd.f32 %v1914, %v1921
      %v1938 = vadd.f32 %v1915, %v1921
      %v1939 = vpack.c.bf16 %v1924, %v1923
      %v1940 = vpack.c.bf16 %v1926, %v1925
      %v1941 = vpack.c.bf16 %v1928, %v1927
      %v1942 = vpack.c.bf16 %v1930, %v1929
      %v1943 = vpack.c.bf16 %v1932, %v1931
      %v1944 = vpack.c.bf16 %v1934, %v1933
      %v1945 = vpack.c.bf16 %v1936, %v1935
      %v1946 = vpack.c.bf16 %v1938, %v1937
      %v1955 = vunpack.c.l.b16 %v1939
      %v1956 = vunpack.c.h.b16 %v1939
      %v1957 = vunpack.c.l.b16 %v1940
      %v1958 = vunpack.c.h.b16 %v1940
      %v1959 = vunpack.c.l.b16 %v1941
      %v1960 = vunpack.c.h.b16 %v1941
      %v1961 = vunpack.c.l.b16 %v1942
      %v1962 = vunpack.c.h.b16 %v1942
      %v1963 = vunpack.c.l.b16 %v1943
      %v1964 = vunpack.c.h.b16 %v1943
      %v1965 = vunpack.c.l.b16 %v1944
      %v1966 = vunpack.c.h.b16 %v1944
      %v1967 = vunpack.c.l.b16 %v1945
      %v1968 = vunpack.c.h.b16 %v1945
      %v1969 = vunpack.c.l.b16 %v1946
      %v1970 = vunpack.c.h.b16 %v1946
      %v1971 = vpack.c.b16 %v1955, %v1955
      %v1972 = vpack.c.b16 %v1956, %v1956
      %v1973 = vpack.c.b16 %v1957, %v1957
      %v1974 = vpack.c.b16 %v1958, %v1958
      %v1975 = vpack.c.b16 %v1959, %v1959
      %v1976 = vpack.c.b16 %v1960, %v1960
      %v1977 = vpack.c.b16 %v1961, %v1961
      %v1978 = vpack.c.b16 %v1962, %v1962
      %v1979 = vpack.c.b16 %v1963, %v1963
      %v1980 = vpack.c.b16 %v1964, %v1964
      %v1981 = vpack.c.b16 %v1965, %v1965
      %v1982 = vpack.c.b16 %v1966, %v1966
      %v1983 = vpack.c.b16 %v1967, %v1967
      %v1984 = vpack.c.b16 %v1968, %v1968
      %v1985 = vpack.c.b16 %v1969, %v1969
      %v1986 = vpack.c.b16 %v1970, %v1970
      %2003 = vst [vmem:[%s247] sm:$0xf] %v1971
      %2004 = vst [vmem:[%s247 + $0x4] sm:$0xf] %v1972
      %2005 = vst [vmem:[%s247 + $0x8] sm:$0xf] %v1973
      %2006 = vst [vmem:[%s247 + $0xc] sm:$0xf] %v1974
      %2007 = vst [vmem:[%s247 + $0x10] sm:$0xf] %v1975
      %2008 = vst [vmem:[%s247 + $0x14] sm:$0xf] %v1976
      %2009 = vst [vmem:[%s247 + $0x18] sm:$0xf] %v1977
      %2010 = vst [vmem:[%s247 + $0x1c] sm:$0xf] %v1978
      %2011 = vst [vmem:[%s247 + $0x20] sm:$0xf] %v1979
      %2012 = vst [vmem:[%s247 + $0x24] sm:$0xf] %v1980
      %2013 = vst [vmem:[%s247 + $0x28] sm:$0xf] %v1981
      %2014 = vst [vmem:[%s247 + $0x2c] sm:$0xf] %v1982
      %2015 = vst [vmem:[%s247 + $0x30] sm:$0xf] %v1983
      %2016 = vst [vmem:[%s247 + $0x34] sm:$0xf] %v1984
      %2017 = vst [vmem:[%s247 + $0x38] sm:$0xf] %v1985
      %2018 = vst [vmem:[%s247 + $0x3c] sm:$0xf] %v1986
      %s2019 = smul.u32 8, %s21
      %p2020 = scmp.lt.s32.totalorder %s19, 1
      %s2021 = scalar_select %p2020, %s19, 1
      %p2022 = scmp.lt.s32.totalorder %s2019, 7
      %s2023 = scalar_select %p2022, %s2019, 7
      %p2024 = scmp.lt.s32.totalorder %s20, 0
      %s2025 = scalar_select %p2024, %s20, 0
      %s2026 = smul.addr %s2023, 2
      %s2027 = sadd.s32 %s2025, %s2026
      %s2028 = smul.addr %s2021, 16
      %s2029 = sadd.s32 %s2027, %s2028
      %s2030 = smul.addr %s2029, 4
      %s2031 = scalar_lea.vmem %s3, %s2030
      // Predicated region
      $region33: #{down_block_apply.1} parent=31 // pred_check
        %p2032 = pneg %p135
      $region34: #{down_block_apply.1} parent=31 // pred_check_branch
        %2034 = sbr.rel (%p2032) target = $region36
      $region35: #{down_block_apply.1} parent=31 // pred_region
        %s2035 = smul.u32 8, %s21
      $region36: #{down_block_apply.1} parent=31 // pred_fallthru
        _
    $region32: #{down_block_apply.1} parent=5 // pred_fallthru
      _
    %p2036 = scmp.le.s32.totalorder 2, %s9
    // Predicated region
    $region37: #{down_block_apply.1} parent=5 // pred_check
      %p2037 = pneg %p2036
    $region38: #{down_block_apply.1} parent=5 // pred_check_branch
      %2039 = sbr.rel (%p2037) target = $region40
    $region39: #{down_block_apply.1} parent=5 // pred_region
      %s2040 = ssub.s32 %s9, 2
      // Predicated region
      $region41: #{down_block_apply.1} parent=39 // pred_check
        %p2041 = pneg %p141
      $region42: #{down_block_apply.1} parent=39 // pred_check_branch
        %2043 = sbr.rel (%p2041) target = $region44
      $region43: #{down_block_apply.1} parent=39 // pred_region
        %s2044 = smul.u32 8, %s24
        %p2045 = scmp.lt.s32.totalorder %s22, 1
        %s2046 = scalar_select %p2045, %s22, 1
        %p2047 = scmp.lt.s32.totalorder %s2044, 7
        %s2048 = scalar_select %p2047, %s2044, 7
        %p2049 = scmp.lt.s32.totalorder %s23, 0
        %s2050 = scalar_select %p2049, %s23, 0
        %s2051 = smul.addr %s2048, 2
        %s2052 = sadd.s32 %s2050, %s2051
        %s2053 = smul.addr %s2046, 16
        %s2054 = sadd.s32 %s2052, %s2053
        %s2055 = smul.addr %s2054, 4
        %s2056 = scalar_lea.vmem %s3, %s2055
      $region44: #{down_block_apply.1} parent=39 // pred_fallthru
        _
    $region40: #{down_block_apply.1} parent=5 // pred_fallthru
      _
  $region6: #{down_block_apply.1} parent=0 // loop_footer
    %s13 = sadd.s32 1, %s9
  $region7: #{down_block_apply.1} parent=0 // loop_footer_branch
    %8 = sbr.rel target = $region3
  $region8: #{down_block_apply.1} parent=0 // loop_exit
    _

</llo_original>
